<compile_context>
chip_gen: v6e
topology: v6e:2x2x1
jax: 0.10.0
libtpu: 0.0.40
codegen_flags: <defaults>
</compile_context>

<pallas_src>
import functools

import jax
import jax.numpy as jnp
from jax.experimental import pallas as pl
from jax.experimental.pallas import tpu as pltpu

D_IN, H1, H2, D_OUT = 784, 512, 256, 10
D_OUT_PAD = 128  # lane-dense padded output width (10 -> 128)


def mlp_kernel(x_ref, w1_ref, b1_ref, w2_ref, b2_ref, w3_ref, b3_ref, o_ref):
    # x tile: (tb, 784) bf16.  Weights: bf16, VMEM-resident.  Biases: f32.
    x = x_ref[...]
    h1 = jnp.dot(x, w1_ref[...], preferred_element_type=jnp.float32)
    h1 = jnp.maximum(h1 + b1_ref[...], 0.0)            # f32 bias + ReLU
    h2 = jnp.dot(h1.astype(jnp.bfloat16), w2_ref[...],
                 preferred_element_type=jnp.float32)
    h2 = jnp.maximum(h2 + b2_ref[...], 0.0)
    out = jnp.dot(h2.astype(jnp.bfloat16), w3_ref[...],
                  preferred_element_type=jnp.float32)
    o_ref[...] = (out + b3_ref[...]).astype(o_ref.dtype)  # (tb, 128) lane-dense


def _round_up(v, m):
    return (v + m - 1) // m * m


def _pick_tb(batch):
    if batch <= 256:
        return _round_up(batch, 8)   # single grid step; tiny problems skip tiling
    if batch <= 1024:
        return 256                   # >= 2 grid steps -> both v7x TCs busy
    return 512


def prepare_params(params):
    """Cast weights to bf16, keep biases f32, zero-pad layer 3 to 128 lanes."""
    w1 = params["w1"].astype(jnp.bfloat16)
    w2 = params["w2"].astype(jnp.bfloat16)
    w3 = jnp.zeros((H2, D_OUT_PAD), jnp.bfloat16)
    w3 = w3.at[:, :D_OUT].set(params["w3"].astype(jnp.bfloat16))
    b1 = params["b1"].astype(jnp.float32).reshape(1, H1)
    b2 = params["b2"].astype(jnp.float32).reshape(1, H2)
    b3 = jnp.zeros((1, D_OUT_PAD), jnp.float32)
    b3 = b3.at[:, :D_OUT].set(params["b3"].astype(jnp.float32).reshape(1, D_OUT))
    return dict(w1=w1, b1=b1, w2=w2, b2=b2, w3=w3, b3=b3)


@functools.partial(jax.jit, static_argnames=("tb",))
def big_model_forward(x, prepared, tb=None):
    """x: [B, 784] float32.  prepared: output of prepare_params.  Returns [B, 10] f32."""
    B = x.shape[0]
    if tb is None:
        tb = _pick_tb(B)
    Bp = _round_up(B, tb)

    xb = x.astype(jnp.bfloat16)
    if Bp != B:
        xb = jnp.pad(xb, ((0, Bp - B), (0, 0)))

    grid = (Bp // tb,)

    # Constant block index => DMA'd once, then revisit-skipped (weights stay
    # resident in VMEM across the whole batch grid).
    resident = lambda shape: pl.BlockSpec(shape, lambda i: (0, 0))

    out = pl.pallas_call(
        mlp_kernel,
        out_shape=jax.ShapeDtypeStruct((Bp, D_OUT_PAD), jnp.float32),
        grid_spec=pltpu.PrefetchScalarGridSpec(
            num_scalar_prefetch=0,
            grid=grid,
            in_specs=[
                pl.BlockSpec((tb, D_IN), lambda i: (i, 0)),  # x tile over batch
                resident((D_IN, H1)),          # w1 (bf16, resident)
                resident((1, H1)),             # b1 (f32)
                resident((H1, H2)),            # w2
                resident((1, H2)),             # b2
                resident((H2, D_OUT_PAD)),     # w3 (padded to 128 lanes)
                resident((1, D_OUT_PAD)),      # b3 (padded)
            ],
            out_specs=pl.BlockSpec((tb, D_OUT_PAD), lambda i: (i, 0)),
        ),
        compiler_params=pltpu.CompilerParams(
            dimension_semantics=("parallel",),   # batch axis -> megacore shardable
        ),
    )(xb, prepared["w1"], prepared["b1"], prepared["w2"], prepared["b2"],
      prepared["w3"], prepared["b3"])

    return out[:B, :D_OUT]


def init_params(key):
    """Deterministic init mimicking nn.Linear default (uniform +-1/sqrt(fan_in)).

    Weights stored as [in, out] so the kernel computes x @ W + b, numerically
    identical to PyTorch's x @ W_pt.T + b.
    """
    def linear(k, fan_in, fan_out):
        kw, kb = jax.random.split(k)
        bound = 1.0 / jnp.sqrt(fan_in)
        w = jax.random.uniform(kw, (fan_in, fan_out), jnp.float32, -bound, bound)
        b = jax.random.uniform(kb, (1, fan_out), jnp.float32, -bound, bound)
        return w, b

    k1, k2, k3 = jax.random.split(key, 3)
    w1, b1 = linear(k1, D_IN, H1)
    w2, b2 = linear(k2, H1, H2)
    w3, b3 = linear(k3, H2, D_OUT)
    return dict(w1=w1, b1=b1, w2=w2, b2=b2, w3=w3, b3=b3)


def reference_forward(x, p):
    """Pure-JAX reference emulating the kernel's bf16-input / f32-accumulate numerics."""
    hi = jax.lax.Precision.HIGHEST
    f = lambda a: a.astype(jnp.bfloat16).astype(jnp.float32)
    h1 = jnp.maximum(jnp.dot(f(x), f(p["w1"]), precision=hi) + p["b1"], 0.0)
    h2 = jnp.maximum(jnp.dot(f(h1), f(p["w2"]), precision=hi) + p["b2"], 0.0)
    return jnp.dot(f(h2), f(p["w3"]), precision=hi) + p["b3"]


if __name__ == "__main__":
    key = jax.random.PRNGKey(0)
    kx, kp = jax.random.split(key)

    params = init_params(kp)
    prepared = prepare_params(params)

    # Small test: B = 8 (single grid step path).
    B = 8
    x = jax.random.normal(kx, (B, D_IN), jnp.float32)
    out = jax.block_until_ready(big_model_forward(x, prepared))
    ref = reference_forward(x, params)
    assert out.shape == (B, D_OUT), out.shape
    assert jnp.allclose(out, ref, atol=5e-3, rtol=5e-3), "mismatch vs reference (B=8)"

    # Exercise the multi-step grid + batch-padding path with a small forced tile.
    B2 = 20
    x2 = jax.random.normal(jax.random.fold_in(kx, 1), (B2, D_IN), jnp.float32)
    out2 = jax.block_until_ready(big_model_forward(x2, prepared, tb=8))
    ref2 = reference_forward(x2, params)
    assert out2.shape == (B2, D_OUT), out2.shape
    assert jnp.allclose(out2, ref2, atol=5e-3, rtol=5e-3), "mismatch vs reference (B=20)"

    print("KERNEL_OK")
</pallas_src>

<mosaic_0001>
module attributes {stable_mosaic.version = 11 : i64} {
  func.func @mlp_kernel(%arg0: i32, %arg1: memref<8x784xbf16, #tpu.memory_space<vmem>>, %arg2: memref<784x512xbf16, #tpu.memory_space<vmem>>, %arg3: memref<1x512xf32, #tpu.memory_space<vmem>>, %arg4: memref<512x256xbf16, #tpu.memory_space<vmem>>, %arg5: memref<1x256xf32, #tpu.memory_space<vmem>>, %arg6: memref<256x128xbf16, #tpu.memory_space<vmem>>, %arg7: memref<1x128xf32, #tpu.memory_space<vmem>>, %arg8: memref<8x128xf32, #tpu.memory_space<vmem>>) attributes {dimension_semantics = [#tpu.dimension_semantics<parallel>], iteration_bounds = array<i64: 1>, scalar_prefetch = 0 : i64, scratch_operands = 0 : i64, tpu.core_type = #tpu.core_type<tc>, window_params = [{transform_indices = @transform_0, window_bounds = array<i64: 8, 784>}, {pipeline_mode = #tpu.pipeline_mode<synchronous>, transform_indices = @transform_1, window_bounds = array<i64: 784, 512>}, {pipeline_mode = #tpu.pipeline_mode<synchronous>, transform_indices = @transform_2, window_bounds = array<i64: 1, 512>}, {pipeline_mode = #tpu.pipeline_mode<synchronous>, transform_indices = @transform_3, window_bounds = array<i64: 512, 256>}, {pipeline_mode = #tpu.pipeline_mode<synchronous>, transform_indices = @transform_4, window_bounds = array<i64: 1, 256>}, {pipeline_mode = #tpu.pipeline_mode<synchronous>, transform_indices = @transform_5, window_bounds = array<i64: 256, 128>}, {pipeline_mode = #tpu.pipeline_mode<synchronous>, transform_indices = @transform_6, window_bounds = array<i64: 1, 128>}, {transform_indices = @transform_7, window_bounds = array<i64: 8, 128>}]} {
    %c0 = arith.constant 0 : index
    %c0_0 = arith.constant 0 : index
    %0 = vector.load %arg1[%c0, %c0_0] : memref<8x784xbf16, #tpu.memory_space<vmem>>, vector<8x784xbf16>
    %c0_1 = arith.constant 0 : index
    %c0_2 = arith.constant 0 : index
    %1 = vector.load %arg2[%c0_1, %c0_2] : memref<784x512xbf16, #tpu.memory_space<vmem>>, vector<784x512xbf16>
    %cst = arith.constant dense<0.000000e+00> : vector<8x512xf32>
    %2 = tpu.matmul %0, %1, %cst {dimension_numbers = #tpu.dot_dimension_numbers<[1], [0], [0], [1], [0, 0, 1, 1], [], []>} : vector<8x784xbf16>, vector<784x512xbf16>, vector<8x512xf32> -> vector<8x512xf32>
    %c0_3 = arith.constant 0 : index
    %c0_4 = arith.constant 0 : index
    %3 = vector.load %arg3[%c0_3, %c0_4] : memref<1x512xf32, #tpu.memory_space<vmem>>, vector<1x512xf32>
    %4 = vector.broadcast %3 : vector<1x512xf32> to vector<8x512xf32>
    %5 = arith.addf %2, %4 : vector<8x512xf32>
    %cst_5 = arith.constant 0.000000e+00 : f32
    %6 = vector.broadcast %cst_5 : f32 to vector<8x512xf32>
    %7 = arith.maximumf %5, %6 : vector<8x512xf32>
    %8 = arith.truncf %7 : vector<8x512xf32> to vector<8x512xbf16>
    %c0_6 = arith.constant 0 : index
    %c0_7 = arith.constant 0 : index
    %9 = vector.load %arg4[%c0_6, %c0_7] : memref<512x256xbf16, #tpu.memory_space<vmem>>, vector<512x256xbf16>
    %cst_8 = arith.constant dense<0.000000e+00> : vector<8x256xf32>
    %10 = tpu.matmul %8, %9, %cst_8 {dimension_numbers = #tpu.dot_dimension_numbers<[1], [0], [0], [1], [0, 0, 1, 1], [], []>} : vector<8x512xbf16>, vector<512x256xbf16>, vector<8x256xf32> -> vector<8x256xf32>
    %c0_9 = arith.constant 0 : index
    %c0_10 = arith.constant 0 : index
    %11 = vector.load %arg5[%c0_9, %c0_10] : memref<1x256xf32, #tpu.memory_space<vmem>>, vector<1x256xf32>
    %12 = vector.broadcast %11 : vector<1x256xf32> to vector<8x256xf32>
    %13 = arith.addf %10, %12 : vector<8x256xf32>
    %cst_11 = arith.constant 0.000000e+00 : f32
    %14 = vector.broadcast %cst_11 : f32 to vector<8x256xf32>
    %15 = arith.maximumf %13, %14 : vector<8x256xf32>
    %16 = arith.truncf %15 : vector<8x256xf32> to vector<8x256xbf16>
    %c0_12 = arith.constant 0 : index
    %c0_13 = arith.constant 0 : index
    %17 = vector.load %arg6[%c0_12, %c0_13] : memref<256x128xbf16, #tpu.memory_space<vmem>>, vector<256x128xbf16>
    %cst_14 = arith.constant dense<0.000000e+00> : vector<8x128xf32>
    %18 = tpu.matmul %16, %17, %cst_14 {dimension_numbers = #tpu.dot_dimension_numbers<[1], [0], [0], [1], [0, 0, 1, 1], [], []>} : vector<8x256xbf16>, vector<256x128xbf16>, vector<8x128xf32> -> vector<8x128xf32>
    %c0_15 = arith.constant 0 : index
    %c0_16 = arith.constant 0 : index
    %19 = vector.load %arg7[%c0_15, %c0_16] : memref<1x128xf32, #tpu.memory_space<vmem>>, vector<1x128xf32>
    %20 = vector.broadcast %19 : vector<1x128xf32> to vector<8x128xf32>
    %21 = arith.addf %18, %20 : vector<8x128xf32>
    %c0_17 = arith.constant 0 : index
    %c0_18 = arith.constant 0 : index
    %22 = vector.load %arg8[%c0_17, %c0_18] : memref<8x128xf32, #tpu.memory_space<vmem>>, vector<8x128xf32>
    tpu.vector_store %arg8[%c0_17, %c0_18], %21 {strides = array<i32>} : memref<8x128xf32, #tpu.memory_space<vmem>>, vector<8x128xf32>,
    return
  }
  func.func @transform_0(%arg0: i32) -> (i32, i32) {
    %c0_i32 = arith.constant 0 : i32
    %c0_i32_0 = arith.constant 0 : i32
    return %arg0, %c0_i32 : i32, i32
  }
  func.func @transform_1(%arg0: i32) -> (i32, i32) {
    %c0_i32 = arith.constant 0 : i32
    %c0_i32_0 = arith.constant 0 : i32
    %c0_i32_1 = arith.constant 0 : i32
    return %c0_i32, %c0_i32_0 : i32, i32
  }
  func.func @transform_2(%arg0: i32) -> (i32, i32) {
    %c0_i32 = arith.constant 0 : i32
    %c0_i32_0 = arith.constant 0 : i32
    %c0_i32_1 = arith.constant 0 : i32
    return %c0_i32, %c0_i32_0 : i32, i32
  }
  func.func @transform_3(%arg0: i32) -> (i32, i32) {
    %c0_i32 = arith.constant 0 : i32
    %c0_i32_0 = arith.constant 0 : i32
    %c0_i32_1 = arith.constant 0 : i32
    return %c0_i32, %c0_i32_0 : i32, i32
  }
  func.func @transform_4(%arg0: i32) -> (i32, i32) {
    %c0_i32 = arith.constant 0 : i32
    %c0_i32_0 = arith.constant 0 : i32
    %c0_i32_1 = arith.constant 0 : i32
    return %c0_i32, %c0_i32_0 : i32, i32
  }
  func.func @transform_5(%arg0: i32) -> (i32, i32) {
    %c0_i32 = arith.constant 0 : i32
    %c0_i32_0 = arith.constant 0 : i32
    %c0_i32_1 = arith.constant 0 : i32
    return %c0_i32, %c0_i32_0 : i32, i32
  }
  func.func @transform_6(%arg0: i32) -> (i32, i32) {
    %c0_i32 = arith.constant 0 : i32
    %c0_i32_0 = arith.constant 0 : i32
    %c0_i32_1 = arith.constant 0 : i32
    return %c0_i32, %c0_i32_0 : i32, i32
  }
  func.func @transform_7(%arg0: i32) -> (i32, i32) {
    %c0_i32 = arith.constant 0 : i32
    %c0_i32_0 = arith.constant 0 : i32
    return %arg0, %c0_i32 : i32, i32
  }
}

</mosaic_0001>

<llo_original>
// kernel: big_model_forward.1
$region0: #{big_model_forward.1}
  #allocation0 [shape = 'u32[]', space=smem, size = 0x4, offset = 0x4, fixed_abs, tag = 'smem constant byte address 0x4 - core index']
  #allocation1 [shape = 'u32[144,128]{1,0:T(1,128)}', space=vmem, size = 0x12000, scoped, tag = 'internal scratch']
  %s0 = inlined_call_operand.vmem [shape: bf16[8,784], index: 0, kind: input, shape index: {}]
  %s1 = inlined_call_operand.hbm [shape: bf16[784,512], index: 1, kind: input, shape index: {}]
  %s2 = inlined_call_operand.vmem [shape: f32[1,512], index: 2, kind: input, shape index: {}]
  %s3 = inlined_call_operand.hbm [shape: bf16[512,256], index: 3, kind: input, shape index: {}]
  %s4 = inlined_call_operand.vmem [shape: f32[1,256], index: 4, kind: input, shape index: {}]
  %s5 = inlined_call_operand.hbm [shape: bf16[256,128], index: 5, kind: input, shape index: {}]
  %s6 = inlined_call_operand.vmem [shape: f32[1,128], index: 6, kind: input, shape index: {}]
  %s7 = inlined_call_operand.hbm [shape: f32[8,128], index: 7, kind: output, shape index: {}]
  %s8 = sld [smem:[#allocation0]]
  $region50: #{big_model_forward.1} parent=0
    _
  %s10 = ssub.s32 1, %s8
  %s11 = scalar_select 0, %s10, %s8
  $region1: #{big_model_forward.1} parent=0
    #allocation2 [shape = 'u8[802816]{0}', space=vmem, size = 0xc4000, scoped, tag = 'input window, operand 1, single buffered']
    #allocation3 [shape = 's32[1]{0}', space=sflag, size = 0x4, scoped, tag = 'scoped memory for big_model_forward.1']
    #allocation4 [shape = 's32[1]{0}', space=sflag, size = 0x4, scoped, tag = 'scoped memory for big_model_forward.1']
    #allocation5 [shape = 'u8[262144]{0}', space=vmem, size = 0x40000, scoped, tag = 'input window, operand 3, single buffered']
    #allocation6 [shape = 's32[1]{0}', space=sflag, size = 0x4, scoped, tag = 'scoped memory for big_model_forward.1']
    #allocation7 [shape = 'u8[65536]{0}', space=vmem, size = 0x10000, scoped, tag = 'input window, operand 5, single buffered']
    #allocation8 [shape = 'u8[4096]{0}', space=vmem, size = 0x1000, scoped, tag = 'output window, operand 0, single buffered']
    %12 = vsyncpa [#allocation3], 0
    %13 = vsyncpa [#allocation6], 0
    %14 = vsyncpa [#allocation4], 0
    // Predicated region
    $region2: #{big_model_forward.1} parent=1 // pred_check
      _
    $region3: #{big_model_forward.1} parent=1 // pred_check_branch
      %16 = sbr.rel (0) target = $region5
    $region4: #{big_model_forward.1} parent=1 // pred_region
      _
    $region5: #{big_model_forward.1} parent=1 // pred_fallthru
      _
    // Predicated region
    $region6: #{big_model_forward.1} parent=1 // pred_check
      _
    $region7: #{big_model_forward.1} parent=1 // pred_check_branch
      %18 = sbr.rel (0) target = $region9
    $region8: #{big_model_forward.1} parent=1 // pred_region
      %s20 = ssub.s32 25088, 25088
      %21 = vsyncadd [#allocation3], %s20
      %s22 = sshll.u32 [#allocation2], 4
      %s23 = int_to_ptr.vmem [resolvable:$true] %s22
      %28 = dma.hbm_to_vmem [thread:$0]  %s1, 25088, %s23, [#allocation3], 256, 256, 16
    $region9: #{big_model_forward.1} parent=1 // pred_fallthru
      _
    // Predicated region
    $region10: #{big_model_forward.1} parent=1 // pred_check
      _
    $region11: #{big_model_forward.1} parent=1 // pred_check_branch
      %30 = sbr.rel (0) target = $region13
    $region12: #{big_model_forward.1} parent=1 // pred_region
      _
    $region13: #{big_model_forward.1} parent=1 // pred_fallthru
      _
    // Predicated region
    $region14: #{big_model_forward.1} parent=1 // pred_check
      _
    $region15: #{big_model_forward.1} parent=1 // pred_check_branch
      %32 = sbr.rel (0) target = $region17
    $region16: #{big_model_forward.1} parent=1 // pred_region
      %s34 = ssub.s32 8192, 8192
      %35 = vsyncadd [#allocation6], %s34
      %s36 = sshll.u32 [#allocation5], 4
      %s37 = int_to_ptr.vmem [resolvable:$true] %s36
      %42 = dma.hbm_to_vmem [thread:$0]  %s3, 8192, %s37, [#allocation6], 128, 128, 8
    $region17: #{big_model_forward.1} parent=1 // pred_fallthru
      _
    // Predicated region
    $region18: #{big_model_forward.1} parent=1 // pred_check
      _
    $region19: #{big_model_forward.1} parent=1 // pred_check_branch
      %44 = sbr.rel (0) target = $region21
    $region20: #{big_model_forward.1} parent=1 // pred_region
      _
    $region21: #{big_model_forward.1} parent=1 // pred_fallthru
      _
    // Predicated region
    $region22: #{big_model_forward.1} parent=1 // pred_check
      _
    $region23: #{big_model_forward.1} parent=1 // pred_check_branch
      %46 = sbr.rel (0) target = $region25
    $region24: #{big_model_forward.1} parent=1 // pred_region
      %s48 = ssub.s32 2048, 2048
      %49 = vsyncadd [#allocation6], %s48
      %s50 = sshll.u32 [#allocation7], 4
      %s51 = int_to_ptr.vmem [resolvable:$true] %s50
      %56 = dma.hbm_to_vmem [thread:$0]  %s5, 2048, %s51, [#allocation6], 64, 64, 4
    $region25: #{big_model_forward.1} parent=1 // pred_fallthru
      _
    // Predicated region
    $region26: #{big_model_forward.1} parent=1 // pred_check
      _
    $region27: #{big_model_forward.1} parent=1 // pred_check_branch
      %58 = sbr.rel (0) target = $region29
    $region28: #{big_model_forward.1} parent=1 // pred_region
      _
    $region29: #{big_model_forward.1} parent=1 // pred_fallthru
      _
    // Predicated region
    $region30: #{big_model_forward.1} parent=1 // pred_check
      _
    $region31: #{big_model_forward.1} parent=1 // pred_check_branch
      %60 = sbr.rel (0) target = $region33
    $region32: #{big_model_forward.1} parent=1 // pred_region
      %61 = dma.done [#allocation3], 25088
    $region33: #{big_model_forward.1} parent=1 // pred_fallthru
      _
    // Predicated region
    $region34: #{big_model_forward.1} parent=1 // pred_check
      _
    $region35: #{big_model_forward.1} parent=1 // pred_check_branch
      %63 = sbr.rel (0) target = $region37
    $region36: #{big_model_forward.1} parent=1 // pred_region
      %64 = dma.done [#allocation6], 8192
    $region37: #{big_model_forward.1} parent=1 // pred_fallthru
      _
    // Predicated region
    $region38: #{big_model_forward.1} parent=1 // pred_check
      _
    $region39: #{big_model_forward.1} parent=1 // pred_check_branch
      %66 = sbr.rel (0) target = $region41
    $region40: #{big_model_forward.1} parent=1 // pred_region
      %67 = dma.done [#allocation6], 2048
    $region41: #{big_model_forward.1} parent=1 // pred_fallthru
      _
    %v69 = vld [vmem:[%s0] sm:$0xff]
    %v70 = vld [vmem:[%s0 + $0x8] sm:$0xff]
    %v71 = vld [vmem:[%s0 + $0x10] sm:$0xff]
    %v72 = vld [vmem:[%s0 + $0x18] sm:$0xf]
    %v73 = vld [vmem:[#allocation2] sm:$0xff]
    %v74 = vld [vmem:[#allocation2 + $0x8] sm:$0xff]
    %v75 = vld [vmem:[#allocation2 + $0x10] sm:$0xff]
    %v76 = vld [vmem:[#allocation2 + $0x18] sm:$0xff]
    %v77 = vld [vmem:[#allocation2 + $0x20] sm:$0xff]
    %v78 = vld [vmem:[#allocation2 + $0x28] sm:$0xff]
    %v79 = vld [vmem:[#allocation2 + $0x30] sm:$0xff]
    %v80 = vld [vmem:[#allocation2 + $0x38] sm:$0xff]
    %v81 = vld [vmem:[#allocation2 + $0x40] sm:$0xff]
    %v82 = vld [vmem:[#allocation2 + $0x48] sm:$0xff]
    %v83 = vld [vmem:[#allocation2 + $0x50] sm:$0xff]
    %v84 = vld [vmem:[#allocation2 + $0x58] sm:$0xff]
    %v85 = vld [vmem:[#allocation2 + $0x60] sm:$0xff]
    %v86 = vld [vmem:[#allocation2 + $0x68] sm:$0xff]
    %v87 = vld [vmem:[#allocation2 + $0x70] sm:$0xff]
    %v88 = vld [vmem:[#allocation2 + $0x78] sm:$0xff]
    %v89 = vld [vmem:[#allocation2 + $0x80] sm:$0xff]
    %v90 = vld [vmem:[#allocation2 + $0x88] sm:$0xff]
    %v91 = vld [vmem:[#allocation2 + $0x90] sm:$0xff]
    %v92 = vld [vmem:[#allocation2 + $0x98] sm:$0xff]
    %v93 = vld [vmem:[#allocation2 + $0xa0] sm:$0xff]
    %v94 = vld [vmem:[#allocation2 + $0xa8] sm:$0xff]
    %v95 = vld [vmem:[#allocation2 + $0xb0] sm:$0xff]
    %v96 = vld [vmem:[#allocation2 + $0xb8] sm:$0xff]
    %v97 = vld [vmem:[#allocation2 + $0xc0] sm:$0xff]
    %v98 = vld [vmem:[#allocation2 + $0xc8] sm:$0xff]
    %v99 = vld [vmem:[#allocation2 + $0xd0] sm:$0xff]
    %v100 = vld [vmem:[#allocation2 + $0xd8] sm:$0xff]
    %v101 = vld [vmem:[#allocation2 + $0xe0] sm:$0xff]
    %v102 = vld [vmem:[#allocation2 + $0xe8] sm:$0xff]
    %v103 = vld [vmem:[#allocation2 + $0xf0] sm:$0xff]
    %v104 = vld [vmem:[#allocation2 + $0xf8] sm:$0xff]
    %v105 = vld [vmem:[#allocation2 + $0x100] sm:$0xff]
    %v106 = vld [vmem:[#allocation2 + $0x108] sm:$0xff]
    %v107 = vld [vmem:[#allocation2 + $0x110] sm:$0xff]
    %v108 = vld [vmem:[#allocation2 + $0x118] sm:$0xff]
    %v109 = vld [vmem:[#allocation2 + $0x120] sm:$0xff]
    %v110 = vld [vmem:[#allocation2 + $0x128] sm:$0xff]
    %v111 = vld [vmem:[#allocation2 + $0x130] sm:$0xff]
    %v112 = vld [vmem:[#allocation2 + $0x138] sm:$0xff]
    %v113 = vld [vmem:[#allocation2 + $0x140] sm:$0xff]
    %v114 = vld [vmem:[#allocation2 + $0x148] sm:$0xff]
    %v115 = vld [vmem:[#allocation2 + $0x150] sm:$0xff]
    %v116 = vld [vmem:[#allocation2 + $0x158] sm:$0xff]
    %v117 = vld [vmem:[#allocation2 + $0x160] sm:$0xff]
    %v118 = vld [vmem:[#allocation2 + $0x168] sm:$0xff]
    %v119 = vld [vmem:[#allocation2 + $0x170] sm:$0xff]
    %v120 = vld [vmem:[#allocation2 + $0x178] sm:$0xff]
    %v121 = vld [vmem:[#allocation2 + $0x180] sm:$0xff]
    %v122 = vld [vmem:[#allocation2 + $0x188] sm:$0xff]
    %v123 = vld [vmem:[#allocation2 + $0x190] sm:$0xff]
    %v124 = vld [vmem:[#allocation2 + $0x198] sm:$0xff]
    %v125 = vld [vmem:[#allocation2 + $0x1a0] sm:$0xff]
    %v126 = vld [vmem:[#allocation2 + $0x1a8] sm:$0xff]
    %v127 = vld [vmem:[#allocation2 + $0x1b0] sm:$0xff]
    %v128 = vld [vmem:[#allocation2 + $0x1b8] sm:$0xff]
    %v129 = vld [vmem:[#allocation2 + $0x1c0] sm:$0xff]
    %v130 = vld [vmem:[#allocation2 + $0x1c8] sm:$0xff]
    %v131 = vld [vmem:[#allocation2 + $0x1d0] sm:$0xff]
    %v132 = vld [vmem:[#allocation2 + $0x1d8] sm:$0xff]
    %v133 = vld [vmem:[#allocation2 + $0x1e0] sm:$0xff]
    %v134 = vld [vmem:[#allocation2 + $0x1e8] sm:$0xff]
    %v135 = vld [vmem:[#allocation2 + $0x1f0] sm:$0xff]
    %v136 = vld [vmem:[#allocation2 + $0x1f8] sm:$0xff]
    %v137 = vld [vmem:[#allocation2 + $0x200] sm:$0xff]
    %v138 = vld [vmem:[#allocation2 + $0x208] sm:$0xff]
    %v139 = vld [vmem:[#allocation2 + $0x210] sm:$0xff]
    %v140 = vld [vmem:[#allocation2 + $0x218] sm:$0xff]
    %v141 = vld [vmem:[#allocation2 + $0x220] sm:$0xff]
    %v142 = vld [vmem:[#allocation2 + $0x228] sm:$0xff]
    %v143 = vld [vmem:[#allocation2 + $0x230] sm:$0xff]
    %v144 = vld [vmem:[#allocation2 + $0x238] sm:$0xff]
    %v145 = vld [vmem:[#allocation2 + $0x240] sm:$0xff]
    %v146 = vld [vmem:[#allocation2 + $0x248] sm:$0xff]
    %v147 = vld [vmem:[#allocation2 + $0x250] sm:$0xff]
    %v148 = vld [vmem:[#allocation2 + $0x258] sm:$0xff]
    %v149 = vld [vmem:[#allocation2 + $0x260] sm:$0xff]
    %v150 = vld [vmem:[#allocation2 + $0x268] sm:$0xff]
    %v151 = vld [vmem:[#allocation2 + $0x270] sm:$0xff]
    %v152 = vld [vmem:[#allocation2 + $0x278] sm:$0xff]
    %v153 = vld [vmem:[#allocation2 + $0x280] sm:$0xff]
    %v154 = vld [vmem:[#allocation2 + $0x288] sm:$0xff]
    %v155 = vld [vmem:[#allocation2 + $0x290] sm:$0xff]
    %v156 = vld [vmem:[#allocation2 + $0x298] sm:$0xff]
    %v157 = vld [vmem:[#allocation2 + $0x2a0] sm:$0xff]
    %v158 = vld [vmem:[#allocation2 + $0x2a8] sm:$0xff]
    %v159 = vld [vmem:[#allocation2 + $0x2b0] sm:$0xff]
    %v160 = vld [vmem:[#allocation2 + $0x2b8] sm:$0xff]
    %v161 = vld [vmem:[#allocation2 + $0x2c0] sm:$0xff]
    %v162 = vld [vmem:[#allocation2 + $0x2c8] sm:$0xff]
    %v163 = vld [vmem:[#allocation2 + $0x2d0] sm:$0xff]
    %v164 = vld [vmem:[#allocation2 + $0x2d8] sm:$0xff]
    %v165 = vld [vmem:[#allocation2 + $0x2e0] sm:$0xff]
    %v166 = vld [vmem:[#allocation2 + $0x2e8] sm:$0xff]
    %v167 = vld [vmem:[#allocation2 + $0x2f0] sm:$0xff]
    %v168 = vld [vmem:[#allocation2 + $0x2f8] sm:$0xff]
    %v169 = vld [vmem:[#allocation2 + $0x300] sm:$0xff]
    %v170 = vld [vmem:[#allocation2 + $0x308] sm:$0xff]
    %v171 = vld [vmem:[#allocation2 + $0x310] sm:$0xff]
    %v172 = vld [vmem:[#allocation2 + $0x318] sm:$0xff]
    %v173 = vld [vmem:[#allocation2 + $0x320] sm:$0xff]
    %v174 = vld [vmem:[#allocation2 + $0x328] sm:$0xff]
    %v175 = vld [vmem:[#allocation2 + $0x330] sm:$0xff]
    %v176 = vld [vmem:[#allocation2 + $0x338] sm:$0xff]
    %v177 = vld [vmem:[#allocation2 + $0x340] sm:$0xff]
    %v178 = vld [vmem:[#allocation2 + $0x348] sm:$0xff]
    %v179 = vld [vmem:[#allocation2 + $0x350] sm:$0xff]
    %v180 = vld [vmem:[#allocation2 + $0x358] sm:$0xff]
    %v181 = vld [vmem:[#allocation2 + $0x360] sm:$0xff]
    %v182 = vld [vmem:[#allocation2 + $0x368] sm:$0xff]
    %v183 = vld [vmem:[#allocation2 + $0x370] sm:$0xff]
    %v184 = vld [vmem:[#allocation2 + $0x378] sm:$0xff]
    %v185 = vld [vmem:[#allocation2 + $0x380] sm:$0xff]
    %v186 = vld [vmem:[#allocation2 + $0x388] sm:$0xff]
    %v187 = vld [vmem:[#allocation2 + $0x390] sm:$0xff]
    %v188 = vld [vmem:[#allocation2 + $0x398] sm:$0xff]
    %v189 = vld [vmem:[#allocation2 + $0x3a0] sm:$0xff]
    %v190 = vld [vmem:[#allocation2 + $0x3a8] sm:$0xff]
    %v191 = vld [vmem:[#allocation2 + $0x3b0] sm:$0xff]
    %v192 = vld [vmem:[#allocation2 + $0x3b8] sm:$0xff]
    %v193 = vld [vmem:[#allocation2 + $0x3c0] sm:$0xff]
    %v194 = vld [vmem:[#allocation2 + $0x3c8] sm:$0xff]
    %v195 = vld [vmem:[#allocation2 + $0x3d0] sm:$0xff]
    %v196 = vld [vmem:[#allocation2 + $0x3d8] sm:$0xff]
    %v197 = vld [vmem:[#allocation2 + $0x3e0] sm:$0xff]
    %v198 = vld [vmem:[#allocation2 + $0x3e8] sm:$0xff]
    %v199 = vld [vmem:[#allocation2 + $0x3f0] sm:$0xff]
    %v200 = vld [vmem:[#allocation2 + $0x3f8] sm:$0xff]
    %v201 = vld [vmem:[#allocation2 + $0x400] sm:$0xff]
    %v202 = vld [vmem:[#allocation2 + $0x408] sm:$0xff]
    %v203 = vld [vmem:[#allocation2 + $0x410] sm:$0xff]
    %v204 = vld [vmem:[#allocation2 + $0x418] sm:$0xff]
    %v205 = vld [vmem:[#allocation2 + $0x420] sm:$0xff]
    %v206 = vld [vmem:[#allocation2 + $0x428] sm:$0xff]
    %v207 = vld [vmem:[#allocation2 + $0x430] sm:$0xff]
    %v208 = vld [vmem:[#allocation2 + $0x438] sm:$0xff]
    %v209 = vld [vmem:[#allocation2 + $0x440] sm:$0xff]
    %v210 = vld [vmem:[#allocation2 + $0x448] sm:$0xff]
    %v211 = vld [vmem:[#allocation2 + $0x450] sm:$0xff]
    %v212 = vld [vmem:[#allocation2 + $0x458] sm:$0xff]
    %v213 = vld [vmem:[#allocation2 + $0x460] sm:$0xff]
    %v214 = vld [vmem:[#allocation2 + $0x468] sm:$0xff]
    %v215 = vld [vmem:[#allocation2 + $0x470] sm:$0xff]
    %v216 = vld [vmem:[#allocation2 + $0x478] sm:$0xff]
    %v217 = vld [vmem:[#allocation2 + $0x480] sm:$0xff]
    %v218 = vld [vmem:[#allocation2 + $0x488] sm:$0xff]
    %v219 = vld [vmem:[#allocation2 + $0x490] sm:$0xff]
    %v220 = vld [vmem:[#allocation2 + $0x498] sm:$0xff]
    %v221 = vld [vmem:[#allocation2 + $0x4a0] sm:$0xff]
    %v222 = vld [vmem:[#allocation2 + $0x4a8] sm:$0xff]
    %v223 = vld [vmem:[#allocation2 + $0x4b0] sm:$0xff]
    %v224 = vld [vmem:[#allocation2 + $0x4b8] sm:$0xff]
    %v225 = vld [vmem:[#allocation2 + $0x4c0] sm:$0xff]
    %v226 = vld [vmem:[#allocation2 + $0x4c8] sm:$0xff]
    %v227 = vld [vmem:[#allocation2 + $0x4d0] sm:$0xff]
    %v228 = vld [vmem:[#allocation2 + $0x4d8] sm:$0xff]
    %v229 = vld [vmem:[#allocation2 + $0x4e0] sm:$0xff]
    %v230 = vld [vmem:[#allocation2 + $0x4e8] sm:$0xff]
    %v231 = vld [vmem:[#allocation2 + $0x4f0] sm:$0xff]
    %v232 = vld [vmem:[#allocation2 + $0x4f8] sm:$0xff]
    %v233 = vld [vmem:[#allocation2 + $0x500] sm:$0xff]
    %v234 = vld [vmem:[#allocation2 + $0x508] sm:$0xff]
    %v235 = vld [vmem:[#allocation2 + $0x510] sm:$0xff]
    %v236 = vld [vmem:[#allocation2 + $0x518] sm:$0xff]
    %v237 = vld [vmem:[#allocation2 + $0x520] sm:$0xff]
    %v238 = vld [vmem:[#allocation2 + $0x528] sm:$0xff]
    %v239 = vld [vmem:[#allocation2 + $0x530] sm:$0xff]
    %v240 = vld [vmem:[#allocation2 + $0x538] sm:$0xff]
    %v241 = vld [vmem:[#allocation2 + $0x540] sm:$0xff]
    %v242 = vld [vmem:[#allocation2 + $0x548] sm:$0xff]
    %v243 = vld [vmem:[#allocation2 + $0x550] sm:$0xff]
    %v244 = vld [vmem:[#allocation2 + $0x558] sm:$0xff]
    %v245 = vld [vmem:[#allocation2 + $0x560] sm:$0xff]
    %v246 = vld [vmem:[#allocation2 + $0x568] sm:$0xff]
    %v247 = vld [vmem:[#allocation2 + $0x570] sm:$0xff]
    %v248 = vld [vmem:[#allocation2 + $0x578] sm:$0xff]
    %v249 = vld [vmem:[#allocation2 + $0x580] sm:$0xff]
    %v250 = vld [vmem:[#allocation2 + $0x588] sm:$0xff]
    %v251 = vld [vmem:[#allocation2 + $0x590] sm:$0xff]
    %v252 = vld [vmem:[#allocation2 + $0x598] sm:$0xff]
    %v253 = vld [vmem:[#allocation2 + $0x5a0] sm:$0xff]
    %v254 = vld [vmem:[#allocation2 + $0x5a8] sm:$0xff]
    %v255 = vld [vmem:[#allocation2 + $0x5b0] sm:$0xff]
    %v256 = vld [vmem:[#allocation2 + $0x5b8] sm:$0xff]
    %v257 = vld [vmem:[#allocation2 + $0x5c0] sm:$0xff]
    %v258 = vld [vmem:[#allocation2 + $0x5c8] sm:$0xff]
    %v259 = vld [vmem:[#allocation2 + $0x5d0] sm:$0xff]
    %v260 = vld [vmem:[#allocation2 + $0x5d8] sm:$0xff]
    %v261 = vld [vmem:[#allocation2 + $0x5e0] sm:$0xff]
    %v262 = vld [vmem:[#allocation2 + $0x5e8] sm:$0xff]
    %v263 = vld [vmem:[#allocation2 + $0x5f0] sm:$0xff]
    %v264 = vld [vmem:[#allocation2 + $0x5f8] sm:$0xff]
    %v265 = vld [vmem:[#allocation2 + $0x600] sm:$0xff]
    %v266 = vld [vmem:[#allocation2 + $0x608] sm:$0xff]
    %v267 = vld [vmem:[#allocation2 + $0x610] sm:$0xff]
    %v268 = vld [vmem:[#allocation2 + $0x618] sm:$0xff]
    %v269 = vld [vmem:[%s2] sm:$0xf]
    %v271 = vlaneseq
    %v272 = vshrl.u32 %v271, 7
    %v273 = vsub.s32 0, %v272
    %v274 = vrot.slane %v269, %v273
    %v275 = vlaneseq
    %v276 = vshrl.u32 %v275, 7
    %v277 = vsub.s32 1, %v276
    %v278 = vrot.slane %v269, %v277
    %v279 = vlaneseq
    %v280 = vshrl.u32 %v279, 7
    %v281 = vsub.s32 2, %v280
    %v282 = vrot.slane %v269, %v281
    %v283 = vlaneseq
    %v284 = vshrl.u32 %v283, 7
    %v285 = vsub.s32 3, %v284
    %v286 = vrot.slane %v269, %v285
    %v295 = vunpack.c.l.b16 %v69
    %v296 = vunpack.c.h.b16 %v69
    %v297 = vunpack.c.l.b16 %v70
    %v298 = vunpack.c.h.b16 %v70
    %v299 = vunpack.c.l.b16 %v71
    %v300 = vunpack.c.h.b16 %v71
    %v301 = vunpack.c.l.b16 %v72
    %v302 = vpack.c.b16 %v295, %v295
    %v303 = vpack.c.b16 %v296, %v296
    %v304 = vpack.c.b16 %v297, %v297
    %v305 = vpack.c.b16 %v298, %v298
    %v306 = vpack.c.b16 %v299, %v299
    %v307 = vpack.c.b16 %v300, %v300
    %v308 = vpack.c.b16 %v301, %v301
    %v511 = vunpack.c.l.b16 %v73
    %v512 = vunpack.c.h.b16 %v73
    %v513 = vunpack.c.l.b16 %v74
    %v514 = vunpack.c.h.b16 %v74
    %v515 = vunpack.c.l.b16 %v75
    %v516 = vunpack.c.h.b16 %v75
    %v517 = vunpack.c.l.b16 %v76
    %v518 = vunpack.c.h.b16 %v76
    %v519 = vunpack.c.l.b16 %v77
    %v520 = vunpack.c.h.b16 %v77
    %v521 = vunpack.c.l.b16 %v78
    %v522 = vunpack.c.h.b16 %v78
    %v523 = vunpack.c.l.b16 %v79
    %v524 = vunpack.c.h.b16 %v79
    %v525 = vunpack.c.l.b16 %v80
    %v526 = vunpack.c.h.b16 %v80
    %v527 = vunpack.c.l.b16 %v81
    %v528 = vunpack.c.h.b16 %v81
    %v529 = vunpack.c.l.b16 %v82
    %v530 = vunpack.c.h.b16 %v82
    %v531 = vunpack.c.l.b16 %v83
    %v532 = vunpack.c.h.b16 %v83
    %v533 = vunpack.c.l.b16 %v84
    %v534 = vunpack.c.h.b16 %v84
    %v535 = vunpack.c.l.b16 %v85
    %v536 = vunpack.c.h.b16 %v85
    %v537 = vunpack.c.l.b16 %v86
    %v538 = vunpack.c.h.b16 %v86
    %v539 = vunpack.c.l.b16 %v87
    %v540 = vunpack.c.h.b16 %v87
    %v541 = vunpack.c.l.b16 %v88
    %v542 = vunpack.c.h.b16 %v88
    %v543 = vunpack.c.l.b16 %v89
    %v544 = vunpack.c.h.b16 %v89
    %v545 = vunpack.c.l.b16 %v90
    %v546 = vunpack.c.h.b16 %v90
    %v547 = vunpack.c.l.b16 %v91
    %v548 = vunpack.c.h.b16 %v91
    %v549 = vunpack.c.l.b16 %v92
    %v550 = vunpack.c.h.b16 %v92
    %v551 = vunpack.c.l.b16 %v93
    %v552 = vunpack.c.h.b16 %v93
    %v553 = vunpack.c.l.b16 %v94
    %v554 = vunpack.c.h.b16 %v94
    %v555 = vunpack.c.l.b16 %v95
    %v556 = vunpack.c.h.b16 %v95
    %v557 = vunpack.c.l.b16 %v96
    %v558 = vunpack.c.h.b16 %v96
    %v559 = vunpack.c.l.b16 %v97
    %v560 = vunpack.c.h.b16 %v97
    %v561 = vunpack.c.l.b16 %v98
    %v562 = vunpack.c.h.b16 %v98
    %v563 = vunpack.c.l.b16 %v99
    %v564 = vunpack.c.h.b16 %v99
    %v565 = vunpack.c.l.b16 %v100
    %v566 = vunpack.c.h.b16 %v100
    %v567 = vunpack.c.l.b16 %v101
    %v568 = vunpack.c.h.b16 %v101
    %v569 = vunpack.c.l.b16 %v102
    %v570 = vunpack.c.h.b16 %v102
    %v571 = vunpack.c.l.b16 %v103
    %v572 = vunpack.c.h.b16 %v103
    %v573 = vunpack.c.l.b16 %v104
    %v574 = vunpack.c.h.b16 %v104
    %v575 = vunpack.c.l.b16 %v105
    %v576 = vunpack.c.h.b16 %v105
    %v577 = vunpack.c.l.b16 %v106
    %v578 = vunpack.c.h.b16 %v106
    %v579 = vunpack.c.l.b16 %v107
    %v580 = vunpack.c.h.b16 %v107
    %v581 = vunpack.c.l.b16 %v108
    %v582 = vunpack.c.h.b16 %v108
    %v583 = vunpack.c.l.b16 %v109
    %v584 = vunpack.c.h.b16 %v109
    %v585 = vunpack.c.l.b16 %v110
    %v586 = vunpack.c.h.b16 %v110
    %v587 = vunpack.c.l.b16 %v111
    %v588 = vunpack.c.h.b16 %v111
    %v589 = vunpack.c.l.b16 %v112
    %v590 = vunpack.c.h.b16 %v112
    %v591 = vunpack.c.l.b16 %v113
    %v592 = vunpack.c.h.b16 %v113
    %v593 = vunpack.c.l.b16 %v114
    %v594 = vunpack.c.h.b16 %v114
    %v595 = vunpack.c.l.b16 %v115
    %v596 = vunpack.c.h.b16 %v115
    %v597 = vunpack.c.l.b16 %v116
    %v598 = vunpack.c.h.b16 %v116
    %v599 = vunpack.c.l.b16 %v117
    %v600 = vunpack.c.h.b16 %v117
    %v601 = vunpack.c.l.b16 %v118
    %v602 = vunpack.c.h.b16 %v118
    %v603 = vunpack.c.l.b16 %v119
    %v604 = vunpack.c.h.b16 %v119
    %v605 = vunpack.c.l.b16 %v120
    %v606 = vunpack.c.h.b16 %v120
    %v607 = vunpack.c.l.b16 %v121
    %v608 = vunpack.c.h.b16 %v121
    %v609 = vunpack.c.l.b16 %v122
    %v610 = vunpack.c.h.b16 %v122
    %v611 = vunpack.c.l.b16 %v123
    %v612 = vunpack.c.h.b16 %v123
    %v613 = vunpack.c.l.b16 %v124
    %v614 = vunpack.c.h.b16 %v124
    %v615 = vunpack.c.l.b16 %v125
    %v616 = vunpack.c.h.b16 %v125
    %v617 = vunpack.c.l.b16 %v126
    %v618 = vunpack.c.h.b16 %v126
    %v619 = vunpack.c.l.b16 %v127
    %v620 = vunpack.c.h.b16 %v127
    %v621 = vunpack.c.l.b16 %v128
    %v622 = vunpack.c.h.b16 %v128
    %v623 = vunpack.c.l.b16 %v129
    %v624 = vunpack.c.h.b16 %v129
    %v625 = vunpack.c.l.b16 %v130
    %v626 = vunpack.c.h.b16 %v130
    %v627 = vunpack.c.l.b16 %v131
    %v628 = vunpack.c.h.b16 %v131
    %v629 = vunpack.c.l.b16 %v132
    %v630 = vunpack.c.h.b16 %v132
    %v631 = vunpack.c.l.b16 %v133
    %v632 = vunpack.c.h.b16 %v133
    %v633 = vunpack.c.l.b16 %v134
    %v634 = vunpack.c.h.b16 %v134
    %v635 = vunpack.c.l.b16 %v135
    %v636 = vunpack.c.h.b16 %v135
    %v637 = vunpack.c.l.b16 %v136
    %v638 = vunpack.c.h.b16 %v136
    %v639 = vunpack.c.l.b16 %v137
    %v640 = vunpack.c.h.b16 %v137
    %v641 = vunpack.c.l.b16 %v138
    %v642 = vunpack.c.h.b16 %v138
    %v643 = vunpack.c.l.b16 %v139
    %v644 = vunpack.c.h.b16 %v139
    %v645 = vunpack.c.l.b16 %v140
    %v646 = vunpack.c.h.b16 %v140
    %v647 = vunpack.c.l.b16 %v141
    %v648 = vunpack.c.h.b16 %v141
    %v649 = vunpack.c.l.b16 %v142
    %v650 = vunpack.c.h.b16 %v142
    %v651 = vunpack.c.l.b16 %v143
    %v652 = vunpack.c.h.b16 %v143
    %v653 = vunpack.c.l.b16 %v144
    %v654 = vunpack.c.h.b16 %v144
    %v655 = vunpack.c.l.b16 %v145
    %v656 = vunpack.c.h.b16 %v145
    %v657 = vunpack.c.l.b16 %v146
    %v658 = vunpack.c.h.b16 %v146
    %v659 = vunpack.c.l.b16 %v147
    %v660 = vunpack.c.h.b16 %v147
    %v661 = vunpack.c.l.b16 %v148
    %v662 = vunpack.c.h.b16 %v148
    %v663 = vunpack.c.l.b16 %v149
    %v664 = vunpack.c.h.b16 %v149
    %v665 = vunpack.c.l.b16 %v150
    %v666 = vunpack.c.h.b16 %v150
    %v667 = vunpack.c.l.b16 %v151
    %v668 = vunpack.c.h.b16 %v151
    %v669 = vunpack.c.l.b16 %v152
    %v670 = vunpack.c.h.b16 %v152
    %v671 = vunpack.c.l.b16 %v153
    %v672 = vunpack.c.h.b16 %v153
    %v673 = vunpack.c.l.b16 %v154
    %v674 = vunpack.c.h.b16 %v154
    %v675 = vunpack.c.l.b16 %v155
    %v676 = vunpack.c.h.b16 %v155
    %v677 = vunpack.c.l.b16 %v156
    %v678 = vunpack.c.h.b16 %v156
    %v679 = vunpack.c.l.b16 %v157
    %v680 = vunpack.c.h.b16 %v157
    %v681 = vunpack.c.l.b16 %v158
    %v682 = vunpack.c.h.b16 %v158
    %v683 = vunpack.c.l.b16 %v159
    %v684 = vunpack.c.h.b16 %v159
    %v685 = vunpack.c.l.b16 %v160
    %v686 = vunpack.c.h.b16 %v160
    %v687 = vunpack.c.l.b16 %v161
    %v688 = vunpack.c.h.b16 %v161
    %v689 = vunpack.c.l.b16 %v162
    %v690 = vunpack.c.h.b16 %v162
    %v691 = vunpack.c.l.b16 %v163
    %v692 = vunpack.c.h.b16 %v163
    %v693 = vunpack.c.l.b16 %v164
    %v694 = vunpack.c.h.b16 %v164
    %v695 = vunpack.c.l.b16 %v165
    %v696 = vunpack.c.h.b16 %v165
    %v697 = vunpack.c.l.b16 %v166
    %v698 = vunpack.c.h.b16 %v166
    %v699 = vunpack.c.l.b16 %v167
    %v700 = vunpack.c.h.b16 %v167
    %v701 = vunpack.c.l.b16 %v168
    %v702 = vunpack.c.h.b16 %v168
    %v703 = vunpack.c.l.b16 %v169
    %v704 = vunpack.c.h.b16 %v169
    %v705 = vunpack.c.l.b16 %v170
    %v706 = vunpack.c.h.b16 %v170
    %v707 = vunpack.c.l.b16 %v171
    %v708 = vunpack.c.h.b16 %v171
    %v709 = vunpack.c.l.b16 %v172
    %v710 = vunpack.c.h.b16 %v172
    %v711 = vunpack.c.l.b16 %v173
    %v712 = vunpack.c.h.b16 %v173
    %v713 = vunpack.c.l.b16 %v174
    %v714 = vunpack.c.h.b16 %v174
    %v715 = vunpack.c.l.b16 %v175
    %v716 = vunpack.c.h.b16 %v175
    %v717 = vunpack.c.l.b16 %v176
    %v718 = vunpack.c.h.b16 %v176
    %v719 = vunpack.c.l.b16 %v177
    %v720 = vunpack.c.h.b16 %v177
    %v721 = vunpack.c.l.b16 %v178
    %v722 = vunpack.c.h.b16 %v178
    %v723 = vunpack.c.l.b16 %v179
    %v724 = vunpack.c.h.b16 %v179
    %v725 = vunpack.c.l.b16 %v180
    %v726 = vunpack.c.h.b16 %v180
    %v727 = vunpack.c.l.b16 %v181
    %v728 = vunpack.c.h.b16 %v181
    %v729 = vunpack.c.l.b16 %v182
    %v730 = vunpack.c.h.b16 %v182
    %v731 = vunpack.c.l.b16 %v183
    %v732 = vunpack.c.h.b16 %v183
    %v733 = vunpack.c.l.b16 %v184
    %v734 = vunpack.c.h.b16 %v184
    %v735 = vunpack.c.l.b16 %v185
    %v736 = vunpack.c.h.b16 %v185
    %v737 = vunpack.c.l.b16 %v186
    %v738 = vunpack.c.h.b16 %v186
    %v739 = vunpack.c.l.b16 %v187
    %v740 = vunpack.c.h.b16 %v187
    %v741 = vunpack.c.l.b16 %v188
    %v742 = vunpack.c.h.b16 %v188
    %v743 = vunpack.c.l.b16 %v189
    %v744 = vunpack.c.h.b16 %v189
    %v745 = vunpack.c.l.b16 %v190
    %v746 = vunpack.c.h.b16 %v190
    %v747 = vunpack.c.l.b16 %v191
    %v748 = vunpack.c.h.b16 %v191
    %v749 = vunpack.c.l.b16 %v192
    %v750 = vunpack.c.h.b16 %v192
    %v751 = vunpack.c.l.b16 %v193
    %v752 = vunpack.c.h.b16 %v193
    %v753 = vunpack.c.l.b16 %v194
    %v754 = vunpack.c.h.b16 %v194
    %v755 = vunpack.c.l.b16 %v195
    %v756 = vunpack.c.h.b16 %v195
    %v757 = vunpack.c.l.b16 %v196
    %v758 = vunpack.c.h.b16 %v196
    %v759 = vunpack.c.l.b16 %v197
    %v760 = vunpack.c.h.b16 %v197
    %v761 = vunpack.c.l.b16 %v198
    %v762 = vunpack.c.h.b16 %v198
    %v763 = vunpack.c.l.b16 %v199
    %v764 = vunpack.c.h.b16 %v199
    %v765 = vunpack.c.l.b16 %v200
    %v766 = vunpack.c.h.b16 %v200
    %v767 = vunpack.c.l.b16 %v201
    %v768 = vunpack.c.h.b16 %v201
    %v769 = vunpack.c.l.b16 %v202
    %v770 = vunpack.c.h.b16 %v202
    %v771 = vunpack.c.l.b16 %v203
    %v772 = vunpack.c.h.b16 %v203
    %v773 = vunpack.c.l.b16 %v204
    %v774 = vunpack.c.h.b16 %v204
    %v775 = vunpack.c.l.b16 %v205
    %v776 = vunpack.c.h.b16 %v205
    %v777 = vunpack.c.l.b16 %v206
    %v778 = vunpack.c.h.b16 %v206
    %v779 = vunpack.c.l.b16 %v207
    %v780 = vunpack.c.h.b16 %v207
    %v781 = vunpack.c.l.b16 %v208
    %v782 = vunpack.c.h.b16 %v208
    %v783 = vunpack.c.l.b16 %v209
    %v784 = vunpack.c.h.b16 %v209
    %v785 = vunpack.c.l.b16 %v210
    %v786 = vunpack.c.h.b16 %v210
    %v787 = vunpack.c.l.b16 %v211
    %v788 = vunpack.c.h.b16 %v211
    %v789 = vunpack.c.l.b16 %v212
    %v790 = vunpack.c.h.b16 %v212
    %v791 = vunpack.c.l.b16 %v213
    %v792 = vunpack.c.h.b16 %v213
    %v793 = vunpack.c.l.b16 %v214
    %v794 = vunpack.c.h.b16 %v214
    %v795 = vunpack.c.l.b16 %v215
    %v796 = vunpack.c.h.b16 %v215
    %v797 = vunpack.c.l.b16 %v216
    %v798 = vunpack.c.h.b16 %v216
    %v799 = vunpack.c.l.b16 %v217
    %v800 = vunpack.c.h.b16 %v217
    %v801 = vunpack.c.l.b16 %v218
    %v802 = vunpack.c.h.b16 %v218
    %v803 = vunpack.c.l.b16 %v219
    %v804 = vunpack.c.h.b16 %v219
    %v805 = vunpack.c.l.b16 %v220
    %v806 = vunpack.c.h.b16 %v220
    %v807 = vunpack.c.l.b16 %v221
    %v808 = vunpack.c.h.b16 %v221
    %v809 = vunpack.c.l.b16 %v222
    %v810 = vunpack.c.h.b16 %v222
    %v811 = vunpack.c.l.b16 %v223
    %v812 = vunpack.c.h.b16 %v223
    %v813 = vunpack.c.l.b16 %v224
    %v814 = vunpack.c.h.b16 %v224
    %v815 = vunpack.c.l.b16 %v225
    %v816 = vunpack.c.h.b16 %v225
    %v817 = vunpack.c.l.b16 %v226
    %v818 = vunpack.c.h.b16 %v226
    %v819 = vunpack.c.l.b16 %v227
    %v820 = vunpack.c.h.b16 %v227
    %v821 = vunpack.c.l.b16 %v228
    %v822 = vunpack.c.h.b16 %v228
    %v823 = vunpack.c.l.b16 %v229
    %v824 = vunpack.c.h.b16 %v229
    %v825 = vunpack.c.l.b16 %v230
    %v826 = vunpack.c.h.b16 %v230
    %v827 = vunpack.c.l.b16 %v231
    %v828 = vunpack.c.h.b16 %v231
    %v829 = vunpack.c.l.b16 %v232
    %v830 = vunpack.c.h.b16 %v232
    %v831 = vunpack.c.l.b16 %v233
    %v832 = vunpack.c.h.b16 %v233
    %v833 = vunpack.c.l.b16 %v234
    %v834 = vunpack.c.h.b16 %v234
    %v835 = vunpack.c.l.b16 %v235
    %v836 = vunpack.c.h.b16 %v235
    %v837 = vunpack.c.l.b16 %v236
    %v838 = vunpack.c.h.b16 %v236
    %v839 = vunpack.c.l.b16 %v237
    %v840 = vunpack.c.h.b16 %v237
    %v841 = vunpack.c.l.b16 %v238
    %v842 = vunpack.c.h.b16 %v238
    %v843 = vunpack.c.l.b16 %v239
    %v844 = vunpack.c.h.b16 %v239
    %v845 = vunpack.c.l.b16 %v240
    %v846 = vunpack.c.h.b16 %v240
    %v847 = vunpack.c.l.b16 %v241
    %v848 = vunpack.c.h.b16 %v241
    %v849 = vunpack.c.l.b16 %v242
    %v850 = vunpack.c.h.b16 %v242
    %v851 = vunpack.c.l.b16 %v243
    %v852 = vunpack.c.h.b16 %v243
    %v853 = vunpack.c.l.b16 %v244
    %v854 = vunpack.c.h.b16 %v244
    %v855 = vunpack.c.l.b16 %v245
    %v856 = vunpack.c.h.b16 %v245
    %v857 = vunpack.c.l.b16 %v246
    %v858 = vunpack.c.h.b16 %v246
    %v859 = vunpack.c.l.b16 %v247
    %v860 = vunpack.c.h.b16 %v247
    %v861 = vunpack.c.l.b16 %v248
    %v862 = vunpack.c.h.b16 %v248
    %v863 = vunpack.c.l.b16 %v249
    %v864 = vunpack.c.h.b16 %v249
    %v865 = vunpack.c.l.b16 %v250
    %v866 = vunpack.c.h.b16 %v250
    %v867 = vunpack.c.l.b16 %v251
    %v868 = vunpack.c.h.b16 %v251
    %v869 = vunpack.c.l.b16 %v252
    %v870 = vunpack.c.h.b16 %v252
    %v871 = vunpack.c.l.b16 %v253
    %v872 = vunpack.c.h.b16 %v253
    %v873 = vunpack.c.l.b16 %v254
    %v874 = vunpack.c.h.b16 %v254
    %v875 = vunpack.c.l.b16 %v255
    %v876 = vunpack.c.h.b16 %v255
    %v877 = vunpack.c.l.b16 %v256
    %v878 = vunpack.c.h.b16 %v256
    %v879 = vunpack.c.l.b16 %v257
    %v880 = vunpack.c.h.b16 %v257
    %v881 = vunpack.c.l.b16 %v258
    %v882 = vunpack.c.h.b16 %v258
    %v883 = vunpack.c.l.b16 %v259
    %v884 = vunpack.c.h.b16 %v259
    %v885 = vunpack.c.l.b16 %v260
    %v886 = vunpack.c.h.b16 %v260
    %v887 = vunpack.c.l.b16 %v261
    %v888 = vunpack.c.h.b16 %v261
    %v889 = vunpack.c.l.b16 %v262
    %v890 = vunpack.c.h.b16 %v262
    %v891 = vunpack.c.l.b16 %v263
    %v892 = vunpack.c.h.b16 %v263
    %v893 = vunpack.c.l.b16 %v264
    %v894 = vunpack.c.h.b16 %v264
    %v895 = vunpack.c.l.b16 %v265
    %v896 = vunpack.c.h.b16 %v265
    %v897 = vunpack.c.l.b16 %v266
    %v898 = vunpack.c.h.b16 %v266
    %v899 = vunpack.c.l.b16 %v267
    %v900 = vunpack.c.h.b16 %v267
    %v901 = vunpack.c.l.b16 %v268
    %v902 = vunpack.c.h.b16 %v268
    %v903 = vpack.c.b16 %v515, %v511
    %v904 = vpack.c.b16 %v516, %v512
    %v905 = vpack.c.b16 %v517, %v513
    %v906 = vpack.c.b16 %v518, %v514
    %v907 = vpack.c.b16 %v523, %v519
    %v908 = vpack.c.b16 %v524, %v520
    %v909 = vpack.c.b16 %v525, %v521
    %v910 = vpack.c.b16 %v526, %v522
    %v911 = vpack.c.b16 %v531, %v527
    %v912 = vpack.c.b16 %v532, %v528
    %v913 = vpack.c.b16 %v533, %v529
    %v914 = vpack.c.b16 %v534, %v530
    %v915 = vpack.c.b16 %v539, %v535
    %v916 = vpack.c.b16 %v540, %v536
    %v917 = vpack.c.b16 %v541, %v537
    %v918 = vpack.c.b16 %v542, %v538
    %v919 = vpack.c.b16 %v547, %v543
    %v920 = vpack.c.b16 %v548, %v544
    %v921 = vpack.c.b16 %v549, %v545
    %v922 = vpack.c.b16 %v550, %v546
    %v923 = vpack.c.b16 %v555, %v551
    %v924 = vpack.c.b16 %v556, %v552
    %v925 = vpack.c.b16 %v557, %v553
    %v926 = vpack.c.b16 %v558, %v554
    %v927 = vpack.c.b16 %v563, %v559
    %v928 = vpack.c.b16 %v564, %v560
    %v929 = vpack.c.b16 %v565, %v561
    %v930 = vpack.c.b16 %v566, %v562
    %v931 = vpack.c.b16 %v571, %v567
    %v932 = vpack.c.b16 %v572, %v568
    %v933 = vpack.c.b16 %v573, %v569
    %v934 = vpack.c.b16 %v574, %v570
    %v935 = vpack.c.b16 %v579, %v575
    %v936 = vpack.c.b16 %v580, %v576
    %v937 = vpack.c.b16 %v581, %v577
    %v938 = vpack.c.b16 %v582, %v578
    %v939 = vpack.c.b16 %v587, %v583
    %v940 = vpack.c.b16 %v588, %v584
    %v941 = vpack.c.b16 %v589, %v585
    %v942 = vpack.c.b16 %v590, %v586
    %v943 = vpack.c.b16 %v595, %v591
    %v944 = vpack.c.b16 %v596, %v592
    %v945 = vpack.c.b16 %v597, %v593
    %v946 = vpack.c.b16 %v598, %v594
    %v947 = vpack.c.b16 %v603, %v599
    %v948 = vpack.c.b16 %v604, %v600
    %v949 = vpack.c.b16 %v605, %v601
    %v950 = vpack.c.b16 %v606, %v602
    %v951 = vpack.c.b16 %v611, %v607
    %v952 = vpack.c.b16 %v612, %v608
    %v953 = vpack.c.b16 %v613, %v609
    %v954 = vpack.c.b16 %v614, %v610
    %v955 = vpack.c.b16 %v619, %v615
    %v956 = vpack.c.b16 %v620, %v616
    %v957 = vpack.c.b16 %v621, %v617
    %v958 = vpack.c.b16 %v622, %v618
    %v959 = vpack.c.b16 %v627, %v623
    %v960 = vpack.c.b16 %v628, %v624
    %v961 = vpack.c.b16 %v629, %v625
    %v962 = vpack.c.b16 %v630, %v626
    %v963 = vpack.c.b16 %v635, %v631
    %v964 = vpack.c.b16 %v636, %v632
    %v965 = vpack.c.b16 %v637, %v633
    %v966 = vpack.c.b16 %v638, %v634
    %v967 = vpack.c.b16 %v643, %v639
    %v968 = vpack.c.b16 %v644, %v640
    %v969 = vpack.c.b16 %v645, %v641
    %v970 = vpack.c.b16 %v646, %v642
    %v971 = vpack.c.b16 %v651, %v647
    %v972 = vpack.c.b16 %v652, %v648
    %v973 = vpack.c.b16 %v653, %v649
    %v974 = vpack.c.b16 %v654, %v650
    %v975 = vpack.c.b16 %v659, %v655
    %v976 = vpack.c.b16 %v660, %v656
    %v977 = vpack.c.b16 %v661, %v657
    %v978 = vpack.c.b16 %v662, %v658
    %v979 = vpack.c.b16 %v667, %v663
    %v980 = vpack.c.b16 %v668, %v664
    %v981 = vpack.c.b16 %v669, %v665
    %v982 = vpack.c.b16 %v670, %v666
    %v983 = vpack.c.b16 %v675, %v671
    %v984 = vpack.c.b16 %v676, %v672
    %v985 = vpack.c.b16 %v677, %v673
    %v986 = vpack.c.b16 %v678, %v674
    %v987 = vpack.c.b16 %v683, %v679
    %v988 = vpack.c.b16 %v684, %v680
    %v989 = vpack.c.b16 %v685, %v681
    %v990 = vpack.c.b16 %v686, %v682
    %v991 = vpack.c.b16 %v691, %v687
    %v992 = vpack.c.b16 %v692, %v688
    %v993 = vpack.c.b16 %v693, %v689
    %v994 = vpack.c.b16 %v694, %v690
    %v995 = vpack.c.b16 %v699, %v695
    %v996 = vpack.c.b16 %v700, %v696
    %v997 = vpack.c.b16 %v701, %v697
    %v998 = vpack.c.b16 %v702, %v698
    %v999 = vpack.c.b16 %v707, %v703
    %v1000 = vpack.c.b16 %v708, %v704
    %v1001 = vpack.c.b16 %v709, %v705
    %v1002 = vpack.c.b16 %v710, %v706
    %v1003 = vpack.c.b16 %v715, %v711
    %v1004 = vpack.c.b16 %v716, %v712
    %v1005 = vpack.c.b16 %v717, %v713
    %v1006 = vpack.c.b16 %v718, %v714
    %v1007 = vpack.c.b16 %v723, %v719
    %v1008 = vpack.c.b16 %v724, %v720
    %v1009 = vpack.c.b16 %v725, %v721
    %v1010 = vpack.c.b16 %v726, %v722
    %v1011 = vpack.c.b16 %v731, %v727
    %v1012 = vpack.c.b16 %v732, %v728
    %v1013 = vpack.c.b16 %v733, %v729
    %v1014 = vpack.c.b16 %v734, %v730
    %v1015 = vpack.c.b16 %v739, %v735
    %v1016 = vpack.c.b16 %v740, %v736
    %v1017 = vpack.c.b16 %v741, %v737
    %v1018 = vpack.c.b16 %v742, %v738
    %v1019 = vpack.c.b16 %v747, %v743
    %v1020 = vpack.c.b16 %v748, %v744
    %v1021 = vpack.c.b16 %v749, %v745
    %v1022 = vpack.c.b16 %v750, %v746
    %v1023 = vpack.c.b16 %v755, %v751
    %v1024 = vpack.c.b16 %v756, %v752
    %v1025 = vpack.c.b16 %v757, %v753
    %v1026 = vpack.c.b16 %v758, %v754
    %v1027 = vpack.c.b16 %v763, %v759
    %v1028 = vpack.c.b16 %v764, %v760
    %v1029 = vpack.c.b16 %v765, %v761
    %v1030 = vpack.c.b16 %v766, %v762
    %v1031 = vpack.c.b16 %v771, %v767
    %v1032 = vpack.c.b16 %v772, %v768
    %v1033 = vpack.c.b16 %v773, %v769
    %v1034 = vpack.c.b16 %v774, %v770
    %v1035 = vpack.c.b16 %v779, %v775
    %v1036 = vpack.c.b16 %v780, %v776
    %v1037 = vpack.c.b16 %v781, %v777
    %v1038 = vpack.c.b16 %v782, %v778
    %v1039 = vpack.c.b16 %v787, %v783
    %v1040 = vpack.c.b16 %v788, %v784
    %v1041 = vpack.c.b16 %v789, %v785
    %v1042 = vpack.c.b16 %v790, %v786
    %v1043 = vpack.c.b16 %v795, %v791
    %v1044 = vpack.c.b16 %v796, %v792
    %v1045 = vpack.c.b16 %v797, %v793
    %v1046 = vpack.c.b16 %v798, %v794
    %v1047 = vpack.c.b16 %v803, %v799
    %v1048 = vpack.c.b16 %v804, %v800
    %v1049 = vpack.c.b16 %v805, %v801
    %v1050 = vpack.c.b16 %v806, %v802
    %v1051 = vpack.c.b16 %v811, %v807
    %v1052 = vpack.c.b16 %v812, %v808
    %v1053 = vpack.c.b16 %v813, %v809
    %v1054 = vpack.c.b16 %v814, %v810
    %v1055 = vpack.c.b16 %v819, %v815
    %v1056 = vpack.c.b16 %v820, %v816
    %v1057 = vpack.c.b16 %v821, %v817
    %v1058 = vpack.c.b16 %v822, %v818
    %v1059 = vpack.c.b16 %v827, %v823
    %v1060 = vpack.c.b16 %v828, %v824
    %v1061 = vpack.c.b16 %v829, %v825
    %v1062 = vpack.c.b16 %v830, %v826
    %v1063 = vpack.c.b16 %v835, %v831
    %v1064 = vpack.c.b16 %v836, %v832
    %v1065 = vpack.c.b16 %v837, %v833
    %v1066 = vpack.c.b16 %v838, %v834
    %v1067 = vpack.c.b16 %v843, %v839
    %v1068 = vpack.c.b16 %v844, %v840
    %v1069 = vpack.c.b16 %v845, %v841
    %v1070 = vpack.c.b16 %v846, %v842
    %v1071 = vpack.c.b16 %v851, %v847
    %v1072 = vpack.c.b16 %v852, %v848
    %v1073 = vpack.c.b16 %v853, %v849
    %v1074 = vpack.c.b16 %v854, %v850
    %v1075 = vpack.c.b16 %v859, %v855
    %v1076 = vpack.c.b16 %v860, %v856
    %v1077 = vpack.c.b16 %v861, %v857
    %v1078 = vpack.c.b16 %v862, %v858
    %v1079 = vpack.c.b16 %v867, %v863
    %v1080 = vpack.c.b16 %v868, %v864
    %v1081 = vpack.c.b16 %v869, %v865
    %v1082 = vpack.c.b16 %v870, %v866
    %v1083 = vpack.c.b16 %v875, %v871
    %v1084 = vpack.c.b16 %v876, %v872
    %v1085 = vpack.c.b16 %v877, %v873
    %v1086 = vpack.c.b16 %v878, %v874
    %v1087 = vpack.c.b16 %v883, %v879
    %v1088 = vpack.c.b16 %v884, %v880
    %v1089 = vpack.c.b16 %v885, %v881
    %v1090 = vpack.c.b16 %v886, %v882
    %v1091 = vpack.c.b16 %v891, %v887
    %v1092 = vpack.c.b16 %v892, %v888
    %v1093 = vpack.c.b16 %v893, %v889
    %v1094 = vpack.c.b16 %v894, %v890
    %v1095 = vpack.c.b16 %v899, %v895
    %v1096 = vpack.c.b16 %v900, %v896
    %v1097 = vpack.c.b16 %v901, %v897
    %v1098 = vpack.c.b16 %v902, %v898
    %vm1295 = vcmask 130048
    %v1297 = vsel %vm1295, %v308, 0
    %1299 = vmatprep.subr.bf16.mxu0 %v932
    %1300 = vmatpush1.bf16.msra.mxu0 %v931
    %1301 = vmatprep.subr.bf16.mxu0 %v928
    %1302 = vmatpush1.bf16.msra.mxu0 %v927
    %1303 = vmatprep.subr.bf16.mxu0 %v924
    %1304 = vmatpush1.bf16.msra.mxu0 %v923
    %1305 = vmatprep.subr.bf16.mxu0 %v920
    %1306 = vmatpush1.bf16.msra.mxu0 %v919
    %1307 = vmatprep.subr.bf16.mxu0 %v916
    %1308 = vmatpush1.bf16.msra.mxu0 %v915
    %1309 = vmatprep.subr.bf16.mxu0 %v912
    %1310 = vmatpush1.bf16.msra.mxu0 %v911
    %1311 = vmatprep.subr.bf16.mxu0 %v908
    %1312 = vmatpush1.bf16.msra.mxu0 %v907
    %1313 = vmatprep.subr.bf16.mxu0 %v904
    %1314 = vmatpush1.bf16.msra.mxu0 %v903
    %1315 = vmatprep.subr.bf16.mxu0 %v964
    %1316 = vmatpush2.bf16.msra.mxu0 %v963
    %1317 = vmatprep.subr.bf16.mxu0 %v960
    %1318 = vmatpush2.bf16.msra.mxu0 %v959
    %1319 = vmatprep.subr.bf16.mxu0 %v956
    %1320 = vmatpush2.bf16.msra.mxu0 %v955
    %1321 = vmatprep.subr.bf16.mxu0 %v952
    %1322 = vmatpush2.bf16.msra.mxu0 %v951
    %1323 = vmatprep.subr.bf16.mxu0 %v948
    %1324 = vmatpush2.bf16.msra.mxu0 %v947
    %1325 = vmatprep.subr.bf16.mxu0 %v944
    %1326 = vmatpush2.bf16.msra.mxu0 %v943
    %1327 = vmatprep.subr.bf16.mxu0 %v940
    %1328 = vmatpush2.bf16.msra.mxu0 %v939
    %1329 = vmatprep.subr.bf16.mxu0 %v936
    %1330 = vmatpush2.bf16.msra.mxu0 %v935
    %1331 = vmatprep.mubr.bf16.mxu0 %v303
    %1332 = vmatmul.mubr.bf16.gmra.mxu0 %v302
    %v1333 = vpop.f32.mrf.mxu0
    %v1334 = vadd.f32 %v274, %v1333
    %v1335 = vpop.f32.mrf.mxu0
    %v1336 = vadd.f32 %v278, %v1335
    %v1337 = vpop.f32.mrf.mxu0
    %v1338 = vpop.f32.mrf.mxu0
    %1339 = vdwg.mxu0
    %1340 = vmatprep.subr.bf16.mxu0 %v996
    %1341 = vmatpush1.bf16.msra.mxu0 %v995
    %1342 = vmatprep.subr.bf16.mxu0 %v992
    %1343 = vmatpush1.bf16.msra.mxu0 %v991
    %1344 = vmatprep.subr.bf16.mxu0 %v988
    %1345 = vmatpush1.bf16.msra.mxu0 %v987
    %1346 = vmatprep.subr.bf16.mxu0 %v984
    %1347 = vmatpush1.bf16.msra.mxu0 %v983
    %1348 = vmatprep.subr.bf16.mxu0 %v980
    %1349 = vmatpush1.bf16.msra.mxu0 %v979
    %1350 = vmatprep.subr.bf16.mxu0 %v976
    %1351 = vmatpush1.bf16.msra.mxu0 %v975
    %1352 = vmatprep.subr.bf16.mxu0 %v972
    %1353 = vmatpush1.bf16.msra.mxu0 %v971
    %1354 = vmatprep.subr.bf16.mxu0 %v968
    %1355 = vmatpush1.bf16.msra.mxu0 %v967
    %1356 = vmatprep.subr.bf16.mxu0 %v1028
    %1357 = vmatpush2.bf16.msra.mxu0 %v1027
    %1358 = vmatprep.subr.bf16.mxu0 %v1024
    %1359 = vmatpush2.bf16.msra.mxu0 %v1023
    %1360 = vmatprep.subr.bf16.mxu0 %v1020
    %1361 = vmatpush2.bf16.msra.mxu0 %v1019
    %1362 = vmatprep.subr.bf16.mxu0 %v1016
    %1363 = vmatpush2.bf16.msra.mxu0 %v1015
    %1364 = vmatprep.subr.bf16.mxu0 %v1012
    %1365 = vmatpush2.bf16.msra.mxu0 %v1011
    %1366 = vmatprep.subr.bf16.mxu0 %v1008
    %1367 = vmatpush2.bf16.msra.mxu0 %v1007
    %1368 = vmatprep.subr.bf16.mxu0 %v1004
    %1369 = vmatpush2.bf16.msra.mxu0 %v1003
    %1370 = vmatprep.subr.bf16.mxu0 %v1000
    %1371 = vmatpush2.bf16.msra.mxu0 %v999
    %1372 = vmatprep.mubr.bf16.mxu0 %v305
    %1373 = vmatmul.mubr.bf16.gmra.mxu0 %v304
    %v1374 = vpop.f32.mrf.mxu0
    %v1375 = vadd.f32 %v1334, %v1374
    %v1376 = vpop.f32.mrf.mxu0
    %v1377 = vadd.f32 %v1336, %v1376
    %v1378 = vpop.f32.mrf.mxu0
    %v1379 = vpop.f32.mrf.mxu0
    %1380 = vdwg.mxu0
    %1381 = vmatprep.subr.bf16.mxu0 %v1060
    %1382 = vmatpush1.bf16.msra.mxu0 %v1059
    %1383 = vmatprep.subr.bf16.mxu0 %v1056
    %1384 = vmatpush1.bf16.msra.mxu0 %v1055
    %1385 = vmatprep.subr.bf16.mxu0 %v1052
    %1386 = vmatpush1.bf16.msra.mxu0 %v1051
    %1387 = vmatprep.subr.bf16.mxu0 %v1048
    %1388 = vmatpush1.bf16.msra.mxu0 %v1047
    %1389 = vmatprep.subr.bf16.mxu0 %v1044
    %1390 = vmatpush1.bf16.msra.mxu0 %v1043
    %1391 = vmatprep.subr.bf16.mxu0 %v1040
    %1392 = vmatpush1.bf16.msra.mxu0 %v1039
    %1393 = vmatprep.subr.bf16.mxu0 %v1036
    %1394 = vmatpush1.bf16.msra.mxu0 %v1035
    %1395 = vmatprep.subr.bf16.mxu0 %v1032
    %1396 = vmatpush1.bf16.msra.mxu0 %v1031
    %1397 = vmatprep.subr.bf16.mxu0 %v1092
    %1398 = vmatpush2.bf16.msra.mxu0 %v1091
    %1399 = vmatprep.subr.bf16.mxu0 %v1088
    %1400 = vmatpush2.bf16.msra.mxu0 %v1087
    %1401 = vmatprep.subr.bf16.mxu0 %v1084
    %1402 = vmatpush2.bf16.msra.mxu0 %v1083
    %1403 = vmatprep.subr.bf16.mxu0 %v1080
    %1404 = vmatpush2.bf16.msra.mxu0 %v1079
    %1405 = vmatprep.subr.bf16.mxu0 %v1076
    %1406 = vmatpush2.bf16.msra.mxu0 %v1075
    %1407 = vmatprep.subr.bf16.mxu0 %v1072
    %1408 = vmatpush2.bf16.msra.mxu0 %v1071
    %1409 = vmatprep.subr.bf16.mxu0 %v1068
    %1410 = vmatpush2.bf16.msra.mxu0 %v1067
    %1411 = vmatprep.subr.bf16.mxu0 %v1064
    %1412 = vmatpush2.bf16.msra.mxu0 %v1063
    %1413 = vmatprep.mubr.bf16.mxu0 %v307
    %1414 = vmatmul.mubr.bf16.gmra.mxu0 %v306
    %v1415 = vpop.f32.mrf.mxu0
    %v1416 = vadd.f32 %v1375, %v1415
    %v1417 = vpop.f32.mrf.mxu0
    %v1418 = vadd.f32 %v1377, %v1417
    %v1419 = vpop.f32.mrf.mxu0
    %v1420 = vpop.f32.mrf.mxu0
    %1421 = vdwg.mxu0
    %1422 = vmatprep.subr.bf16.mxu0 0
    %1423 = vmatpush1.bf16.msra.mxu0 0
    %1424 = vmatprep.subr.bf16.mxu0 0
    %1425 = vmatpush1.bf16.msra.mxu0 0
    %1426 = vmatprep.subr.bf16.mxu0 0
    %1427 = vmatpush1.bf16.msra.mxu0 0
    %1428 = vmatprep.subr.bf16.mxu0 0
    %1429 = vmatpush1.bf16.msra.mxu0 0
    %1430 = vmatprep.subr.bf16.mxu0 0
    %1431 = vmatpush1.bf16.msra.mxu0 0
    %1432 = vmatprep.subr.bf16.mxu0 0
    %1433 = vmatpush1.bf16.msra.mxu0 0
    %1434 = vmatprep.subr.bf16.mxu0 0
    %1435 = vmatpush1.bf16.msra.mxu0 0
    %1436 = vmatprep.subr.bf16.mxu0 %v1096
    %1437 = vmatpush1.bf16.msra.mxu0 %v1095
    %1438 = vmatprep.subr.bf16.mxu0 0
    %1439 = vmatpush2.bf16.msra.mxu0 0
    %1440 = vmatprep.subr.bf16.mxu0 0
    %1441 = vmatpush2.bf16.msra.mxu0 0
    %1442 = vmatprep.subr.bf16.mxu0 0
    %1443 = vmatpush2.bf16.msra.mxu0 0
    %1444 = vmatprep.subr.bf16.mxu0 0
    %1445 = vmatpush2.bf16.msra.mxu0 0
    %1446 = vmatprep.subr.bf16.mxu0 0
    %1447 = vmatpush2.bf16.msra.mxu0 0
    %1448 = vmatprep.subr.bf16.mxu0 0
    %1449 = vmatpush2.bf16.msra.mxu0 0
    %1450 = vmatprep.subr.bf16.mxu0 0
    %1451 = vmatpush2.bf16.msra.mxu0 0
    %1452 = vmatprep.subr.bf16.mxu0 0
    %1453 = vmatpush2.bf16.msra.mxu0 0
    %1454 = vmatprep.mubr.bf16.mxu0 0
    %1455 = vmatmul.mubr.bf16.gmra.mxu0 %v1297
    %v1456 = vpop.f32.mrf.mxu0
    %v1457 = vadd.f32 %v1416, %v1456
    %v1458 = vpop.f32.mrf.mxu0
    %v1459 = vadd.f32 %v1418, %v1458
    %v1460 = vpop.f32.mrf.mxu0
    %v1461 = vpop.f32.mrf.mxu0
    %1462 = vdwg.mxu0
    %1463 = vmatprep.subr.bf16.mxu0 %v934
    %1464 = vmatpush1.bf16.msra.mxu0 %v933
    %1465 = vmatprep.subr.bf16.mxu0 %v930
    %1466 = vmatpush1.bf16.msra.mxu0 %v929
    %1467 = vmatprep.subr.bf16.mxu0 %v926
    %1468 = vmatpush1.bf16.msra.mxu0 %v925
    %1469 = vmatprep.subr.bf16.mxu0 %v922
    %1470 = vmatpush1.bf16.msra.mxu0 %v921
    %1471 = vmatprep.subr.bf16.mxu0 %v918
    %1472 = vmatpush1.bf16.msra.mxu0 %v917
    %1473 = vmatprep.subr.bf16.mxu0 %v914
    %1474 = vmatpush1.bf16.msra.mxu0 %v913
    %1475 = vmatprep.subr.bf16.mxu0 %v910
    %1476 = vmatpush1.bf16.msra.mxu0 %v909
    %1477 = vmatprep.subr.bf16.mxu0 %v906
    %1478 = vmatpush1.bf16.msra.mxu0 %v905
    %1479 = vmatprep.subr.bf16.mxu0 %v966
    %1480 = vmatpush2.bf16.msra.mxu0 %v965
    %1481 = vmatprep.subr.bf16.mxu0 %v962
    %1482 = vmatpush2.bf16.msra.mxu0 %v961
    %1483 = vmatprep.subr.bf16.mxu0 %v958
    %1484 = vmatpush2.bf16.msra.mxu0 %v957
    %1485 = vmatprep.subr.bf16.mxu0 %v954
    %1486 = vmatpush2.bf16.msra.mxu0 %v953
    %1487 = vmatprep.subr.bf16.mxu0 %v950
    %1488 = vmatpush2.bf16.msra.mxu0 %v949
    %1489 = vmatprep.subr.bf16.mxu0 %v946
    %1490 = vmatpush2.bf16.msra.mxu0 %v945
    %1491 = vmatprep.subr.bf16.mxu0 %v942
    %1492 = vmatpush2.bf16.msra.mxu0 %v941
    %1493 = vmatprep.subr.bf16.mxu0 %v938
    %1494 = vmatpush2.bf16.msra.mxu0 %v937
    %1495 = vmatprep.mubr.bf16.mxu0 %v303
    %1496 = vmatmul.mubr.bf16.gmra.mxu0 %v302
    %v1497 = vpop.f32.mrf.mxu0
    %v1498 = vadd.f32 %v282, %v1497
    %v1499 = vpop.f32.mrf.mxu0
    %v1500 = vadd.f32 %v286, %v1499
    %v1501 = vpop.f32.mrf.mxu0
    %v1502 = vpop.f32.mrf.mxu0
    %1503 = vdwg.mxu0
    %1504 = vmatprep.subr.bf16.mxu0 %v998
    %1505 = vmatpush1.bf16.msra.mxu0 %v997
    %1506 = vmatprep.subr.bf16.mxu0 %v994
    %1507 = vmatpush1.bf16.msra.mxu0 %v993
    %1508 = vmatprep.subr.bf16.mxu0 %v990
    %1509 = vmatpush1.bf16.msra.mxu0 %v989
    %1510 = vmatprep.subr.bf16.mxu0 %v986
    %1511 = vmatpush1.bf16.msra.mxu0 %v985
    %1512 = vmatprep.subr.bf16.mxu0 %v982
    %1513 = vmatpush1.bf16.msra.mxu0 %v981
    %1514 = vmatprep.subr.bf16.mxu0 %v978
    %1515 = vmatpush1.bf16.msra.mxu0 %v977
    %1516 = vmatprep.subr.bf16.mxu0 %v974
    %1517 = vmatpush1.bf16.msra.mxu0 %v973
    %1518 = vmatprep.subr.bf16.mxu0 %v970
    %1519 = vmatpush1.bf16.msra.mxu0 %v969
    %1520 = vmatprep.subr.bf16.mxu0 %v1030
    %1521 = vmatpush2.bf16.msra.mxu0 %v1029
    %1522 = vmatprep.subr.bf16.mxu0 %v1026
    %1523 = vmatpush2.bf16.msra.mxu0 %v1025
    %1524 = vmatprep.subr.bf16.mxu0 %v1022
    %1525 = vmatpush2.bf16.msra.mxu0 %v1021
    %1526 = vmatprep.subr.bf16.mxu0 %v1018
    %1527 = vmatpush2.bf16.msra.mxu0 %v1017
    %1528 = vmatprep.subr.bf16.mxu0 %v1014
    %1529 = vmatpush2.bf16.msra.mxu0 %v1013
    %1530 = vmatprep.subr.bf16.mxu0 %v1010
    %1531 = vmatpush2.bf16.msra.mxu0 %v1009
    %1532 = vmatprep.subr.bf16.mxu0 %v1006
    %1533 = vmatpush2.bf16.msra.mxu0 %v1005
    %1534 = vmatprep.subr.bf16.mxu0 %v1002
    %1535 = vmatpush2.bf16.msra.mxu0 %v1001
    %1536 = vmatprep.mubr.bf16.mxu0 %v305
    %1537 = vmatmul.mubr.bf16.gmra.mxu0 %v304
    %v1538 = vpop.f32.mrf.mxu0
    %v1539 = vadd.f32 %v1498, %v1538
    %v1540 = vpop.f32.mrf.mxu0
    %v1541 = vadd.f32 %v1500, %v1540
    %v1542 = vpop.f32.mrf.mxu0
    %v1543 = vpop.f32.mrf.mxu0
    %1544 = vdwg.mxu0
    %1545 = vmatprep.subr.bf16.mxu0 %v1062
    %1546 = vmatpush1.bf16.msra.mxu0 %v1061
    %1547 = vmatprep.subr.bf16.mxu0 %v1058
    %1548 = vmatpush1.bf16.msra.mxu0 %v1057
    %1549 = vmatprep.subr.bf16.mxu0 %v1054
    %1550 = vmatpush1.bf16.msra.mxu0 %v1053
    %1551 = vmatprep.subr.bf16.mxu0 %v1050
    %1552 = vmatpush1.bf16.msra.mxu0 %v1049
    %1553 = vmatprep.subr.bf16.mxu0 %v1046
    %1554 = vmatpush1.bf16.msra.mxu0 %v1045
    %1555 = vmatprep.subr.bf16.mxu0 %v1042
    %1556 = vmatpush1.bf16.msra.mxu0 %v1041
    %1557 = vmatprep.subr.bf16.mxu0 %v1038
    %1558 = vmatpush1.bf16.msra.mxu0 %v1037
    %1559 = vmatprep.subr.bf16.mxu0 %v1034
    %1560 = vmatpush1.bf16.msra.mxu0 %v1033
    %1561 = vmatprep.subr.bf16.mxu0 %v1094
    %1562 = vmatpush2.bf16.msra.mxu0 %v1093
    %1563 = vmatprep.subr.bf16.mxu0 %v1090
    %1564 = vmatpush2.bf16.msra.mxu0 %v1089
    %1565 = vmatprep.subr.bf16.mxu0 %v1086
    %1566 = vmatpush2.bf16.msra.mxu0 %v1085
    %1567 = vmatprep.subr.bf16.mxu0 %v1082
    %1568 = vmatpush2.bf16.msra.mxu0 %v1081
    %1569 = vmatprep.subr.bf16.mxu0 %v1078
    %1570 = vmatpush2.bf16.msra.mxu0 %v1077
    %1571 = vmatprep.subr.bf16.mxu0 %v1074
    %1572 = vmatpush2.bf16.msra.mxu0 %v1073
    %1573 = vmatprep.subr.bf16.mxu0 %v1070
    %1574 = vmatpush2.bf16.msra.mxu0 %v1069
    %1575 = vmatprep.subr.bf16.mxu0 %v1066
    %1576 = vmatpush2.bf16.msra.mxu0 %v1065
    %1577 = vmatprep.mubr.bf16.mxu0 %v307
    %1578 = vmatmul.mubr.bf16.gmra.mxu0 %v306
    %v1579 = vpop.f32.mrf.mxu0
    %v1580 = vadd.f32 %v1539, %v1579
    %v1581 = vpop.f32.mrf.mxu0
    %v1582 = vadd.f32 %v1541, %v1581
    %v1583 = vpop.f32.mrf.mxu0
    %v1584 = vpop.f32.mrf.mxu0
    %1585 = vdwg.mxu0
    %1586 = vmatprep.subr.bf16.mxu0 0
    %1587 = vmatpush1.bf16.msra.mxu0 0
    %1588 = vmatprep.subr.bf16.mxu0 0
    %1589 = vmatpush1.bf16.msra.mxu0 0
    %1590 = vmatprep.subr.bf16.mxu0 0
    %1591 = vmatpush1.bf16.msra.mxu0 0
    %1592 = vmatprep.subr.bf16.mxu0 0
    %1593 = vmatpush1.bf16.msra.mxu0 0
    %1594 = vmatprep.subr.bf16.mxu0 0
    %1595 = vmatpush1.bf16.msra.mxu0 0
    %1596 = vmatprep.subr.bf16.mxu0 0
    %1597 = vmatpush1.bf16.msra.mxu0 0
    %1598 = vmatprep.subr.bf16.mxu0 0
    %1599 = vmatpush1.bf16.msra.mxu0 0
    %1600 = vmatprep.subr.bf16.mxu0 %v1098
    %1601 = vmatpush1.bf16.msra.mxu0 %v1097
    %1602 = vmatprep.subr.bf16.mxu0 0
    %1603 = vmatpush2.bf16.msra.mxu0 0
    %1604 = vmatprep.subr.bf16.mxu0 0
    %1605 = vmatpush2.bf16.msra.mxu0 0
    %1606 = vmatprep.subr.bf16.mxu0 0
    %1607 = vmatpush2.bf16.msra.mxu0 0
    %1608 = vmatprep.subr.bf16.mxu0 0
    %1609 = vmatpush2.bf16.msra.mxu0 0
    %1610 = vmatprep.subr.bf16.mxu0 0
    %1611 = vmatpush2.bf16.msra.mxu0 0
    %1612 = vmatprep.subr.bf16.mxu0 0
    %1613 = vmatpush2.bf16.msra.mxu0 0
    %1614 = vmatprep.subr.bf16.mxu0 0
    %1615 = vmatpush2.bf16.msra.mxu0 0
    %1616 = vmatprep.subr.bf16.mxu0 0
    %1617 = vmatpush2.bf16.msra.mxu0 0
    %1618 = vmatprep.mubr.bf16.mxu0 0
    %1619 = vmatmul.mubr.bf16.gmra.mxu0 %v1297
    %v1620 = vpop.f32.mrf.mxu0
    %v1621 = vadd.f32 %v1580, %v1620
    %v1622 = vpop.f32.mrf.mxu0
    %v1623 = vadd.f32 %v1582, %v1622
    %v1624 = vpop.f32.mrf.mxu0
    %v1625 = vpop.f32.mrf.mxu0
    %1626 = vdwg.mxu0
    %v1627 = vmax.f32 %v1457, 0.0
    %v1628 = vmax.f32 %v1459, 0.0
    %v1629 = vmax.f32 %v1621, 0.0
    %v1630 = vmax.f32 %v1623, 0.0
    %v1631 = vpack.c.bf16 %v1627, %v1627
    %v1632 = vpack.c.bf16 %v1628, %v1628
    %v1633 = vpack.c.bf16 %v1629, %v1629
    %v1634 = vpack.c.bf16 %v1630, %v1630
    %v1635 = vld [vmem:[#allocation5] sm:$0xff]
    %v1636 = vld [vmem:[#allocation5 + $0x8] sm:$0xff]
    %v1637 = vld [vmem:[#allocation5 + $0x10] sm:$0xff]
    %v1638 = vld [vmem:[#allocation5 + $0x18] sm:$0xff]
    %v1639 = vld [vmem:[#allocation5 + $0x20] sm:$0xff]
    %v1640 = vld [vmem:[#allocation5 + $0x28] sm:$0xff]
    %v1641 = vld [vmem:[#allocation5 + $0x30] sm:$0xff]
    %v1642 = vld [vmem:[#allocation5 + $0x38] sm:$0xff]
    %v1643 = vld [vmem:[#allocation5 + $0x40] sm:$0xff]
    %v1644 = vld [vmem:[#allocation5 + $0x48] sm:$0xff]
    %v1645 = vld [vmem:[#allocation5 + $0x50] sm:$0xff]
    %v1646 = vld [vmem:[#allocation5 + $0x58] sm:$0xff]
    %v1647 = vld [vmem:[#allocation5 + $0x60] sm:$0xff]
    %v1648 = vld [vmem:[#allocation5 + $0x68] sm:$0xff]
    %v1649 = vld [vmem:[#allocation5 + $0x70] sm:$0xff]
    %v1650 = vld [vmem:[#allocation5 + $0x78] sm:$0xff]
    %v1651 = vld [vmem:[#allocation5 + $0x80] sm:$0xff]
    %v1652 = vld [vmem:[#allocation5 + $0x88] sm:$0xff]
    %v1653 = vld [vmem:[#allocation5 + $0x90] sm:$0xff]
    %v1654 = vld [vmem:[#allocation5 + $0x98] sm:$0xff]
    %v1655 = vld [vmem:[#allocation5 + $0xa0] sm:$0xff]
    %v1656 = vld [vmem:[#allocation5 + $0xa8] sm:$0xff]
    %v1657 = vld [vmem:[#allocation5 + $0xb0] sm:$0xff]
    %v1658 = vld [vmem:[#allocation5 + $0xb8] sm:$0xff]
    %v1659 = vld [vmem:[#allocation5 + $0xc0] sm:$0xff]
    %v1660 = vld [vmem:[#allocation5 + $0xc8] sm:$0xff]
    %v1661 = vld [vmem:[#allocation5 + $0xd0] sm:$0xff]
    %v1662 = vld [vmem:[#allocation5 + $0xd8] sm:$0xff]
    %v1663 = vld [vmem:[#allocation5 + $0xe0] sm:$0xff]
    %v1664 = vld [vmem:[#allocation5 + $0xe8] sm:$0xff]
    %v1665 = vld [vmem:[#allocation5 + $0xf0] sm:$0xff]
    %v1666 = vld [vmem:[#allocation5 + $0xf8] sm:$0xff]
    %v1667 = vld [vmem:[#allocation5 + $0x100] sm:$0xff]
    %v1668 = vld [vmem:[#allocation5 + $0x108] sm:$0xff]
    %v1669 = vld [vmem:[#allocation5 + $0x110] sm:$0xff]
    %v1670 = vld [vmem:[#allocation5 + $0x118] sm:$0xff]
    %v1671 = vld [vmem:[#allocation5 + $0x120] sm:$0xff]
    %v1672 = vld [vmem:[#allocation5 + $0x128] sm:$0xff]
    %v1673 = vld [vmem:[#allocation5 + $0x130] sm:$0xff]
    %v1674 = vld [vmem:[#allocation5 + $0x138] sm:$0xff]
    %v1675 = vld [vmem:[#allocation5 + $0x140] sm:$0xff]
    %v1676 = vld [vmem:[#allocation5 + $0x148] sm:$0xff]
    %v1677 = vld [vmem:[#allocation5 + $0x150] sm:$0xff]
    %v1678 = vld [vmem:[#allocation5 + $0x158] sm:$0xff]
    %v1679 = vld [vmem:[#allocation5 + $0x160] sm:$0xff]
    %v1680 = vld [vmem:[#allocation5 + $0x168] sm:$0xff]
    %v1681 = vld [vmem:[#allocation5 + $0x170] sm:$0xff]
    %v1682 = vld [vmem:[#allocation5 + $0x178] sm:$0xff]
    %v1683 = vld [vmem:[#allocation5 + $0x180] sm:$0xff]
    %v1684 = vld [vmem:[#allocation5 + $0x188] sm:$0xff]
    %v1685 = vld [vmem:[#allocation5 + $0x190] sm:$0xff]
    %v1686 = vld [vmem:[#allocation5 + $0x198] sm:$0xff]
    %v1687 = vld [vmem:[#allocation5 + $0x1a0] sm:$0xff]
    %v1688 = vld [vmem:[#allocation5 + $0x1a8] sm:$0xff]
    %v1689 = vld [vmem:[#allocation5 + $0x1b0] sm:$0xff]
    %v1690 = vld [vmem:[#allocation5 + $0x1b8] sm:$0xff]
    %v1691 = vld [vmem:[#allocation5 + $0x1c0] sm:$0xff]
    %v1692 = vld [vmem:[#allocation5 + $0x1c8] sm:$0xff]
    %v1693 = vld [vmem:[#allocation5 + $0x1d0] sm:$0xff]
    %v1694 = vld [vmem:[#allocation5 + $0x1d8] sm:$0xff]
    %v1695 = vld [vmem:[#allocation5 + $0x1e0] sm:$0xff]
    %v1696 = vld [vmem:[#allocation5 + $0x1e8] sm:$0xff]
    %v1697 = vld [vmem:[#allocation5 + $0x1f0] sm:$0xff]
    %v1698 = vld [vmem:[#allocation5 + $0x1f8] sm:$0xff]
    %v1699 = vld [vmem:[%s4] sm:$0x3]
    %v1701 = vlaneseq
    %v1702 = vshrl.u32 %v1701, 7
    %v1703 = vsub.s32 0, %v1702
    %v1704 = vrot.slane %v1699, %v1703
    %v1705 = vlaneseq
    %v1706 = vshrl.u32 %v1705, 7
    %v1707 = vsub.s32 1, %v1706
    %v1708 = vrot.slane %v1699, %v1707
    %v1775 = vunpack.c.l.b16 %v1635
    %v1776 = vunpack.c.h.b16 %v1635
    %v1777 = vunpack.c.l.b16 %v1636
    %v1778 = vunpack.c.h.b16 %v1636
    %v1779 = vunpack.c.l.b16 %v1637
    %v1780 = vunpack.c.h.b16 %v1637
    %v1781 = vunpack.c.l.b16 %v1638
    %v1782 = vunpack.c.h.b16 %v1638
    %v1783 = vunpack.c.l.b16 %v1639
    %v1784 = vunpack.c.h.b16 %v1639
    %v1785 = vunpack.c.l.b16 %v1640
    %v1786 = vunpack.c.h.b16 %v1640
    %v1787 = vunpack.c.l.b16 %v1641
    %v1788 = vunpack.c.h.b16 %v1641
    %v1789 = vunpack.c.l.b16 %v1642
    %v1790 = vunpack.c.h.b16 %v1642
    %v1791 = vunpack.c.l.b16 %v1643
    %v1792 = vunpack.c.h.b16 %v1643
    %v1793 = vunpack.c.l.b16 %v1644
    %v1794 = vunpack.c.h.b16 %v1644
    %v1795 = vunpack.c.l.b16 %v1645
    %v1796 = vunpack.c.h.b16 %v1645
    %v1797 = vunpack.c.l.b16 %v1646
    %v1798 = vunpack.c.h.b16 %v1646
    %v1799 = vunpack.c.l.b16 %v1647
    %v1800 = vunpack.c.h.b16 %v1647
    %v1801 = vunpack.c.l.b16 %v1648
    %v1802 = vunpack.c.h.b16 %v1648
    %v1803 = vunpack.c.l.b16 %v1649
    %v1804 = vunpack.c.h.b16 %v1649
    %v1805 = vunpack.c.l.b16 %v1650
    %v1806 = vunpack.c.h.b16 %v1650
    %v1807 = vunpack.c.l.b16 %v1651
    %v1808 = vunpack.c.h.b16 %v1651
    %v1809 = vunpack.c.l.b16 %v1652
    %v1810 = vunpack.c.h.b16 %v1652
    %v1811 = vunpack.c.l.b16 %v1653
    %v1812 = vunpack.c.h.b16 %v1653
    %v1813 = vunpack.c.l.b16 %v1654
    %v1814 = vunpack.c.h.b16 %v1654
    %v1815 = vunpack.c.l.b16 %v1655
    %v1816 = vunpack.c.h.b16 %v1655
    %v1817 = vunpack.c.l.b16 %v1656
    %v1818 = vunpack.c.h.b16 %v1656
    %v1819 = vunpack.c.l.b16 %v1657
    %v1820 = vunpack.c.h.b16 %v1657
    %v1821 = vunpack.c.l.b16 %v1658
    %v1822 = vunpack.c.h.b16 %v1658
    %v1823 = vunpack.c.l.b16 %v1659
    %v1824 = vunpack.c.h.b16 %v1659
    %v1825 = vunpack.c.l.b16 %v1660
    %v1826 = vunpack.c.h.b16 %v1660
    %v1827 = vunpack.c.l.b16 %v1661
    %v1828 = vunpack.c.h.b16 %v1661
    %v1829 = vunpack.c.l.b16 %v1662
    %v1830 = vunpack.c.h.b16 %v1662
    %v1831 = vunpack.c.l.b16 %v1663
    %v1832 = vunpack.c.h.b16 %v1663
    %v1833 = vunpack.c.l.b16 %v1664
    %v1834 = vunpack.c.h.b16 %v1664
    %v1835 = vunpack.c.l.b16 %v1665
    %v1836 = vunpack.c.h.b16 %v1665
    %v1837 = vunpack.c.l.b16 %v1666
    %v1838 = vunpack.c.h.b16 %v1666
    %v1839 = vunpack.c.l.b16 %v1667
    %v1840 = vunpack.c.h.b16 %v1667
    %v1841 = vunpack.c.l.b16 %v1668
    %v1842 = vunpack.c.h.b16 %v1668
    %v1843 = vunpack.c.l.b16 %v1669
    %v1844 = vunpack.c.h.b16 %v1669
    %v1845 = vunpack.c.l.b16 %v1670
    %v1846 = vunpack.c.h.b16 %v1670
    %v1847 = vunpack.c.l.b16 %v1671
    %v1848 = vunpack.c.h.b16 %v1671
    %v1849 = vunpack.c.l.b16 %v1672
    %v1850 = vunpack.c.h.b16 %v1672
    %v1851 = vunpack.c.l.b16 %v1673
    %v1852 = vunpack.c.h.b16 %v1673
    %v1853 = vunpack.c.l.b16 %v1674
    %v1854 = vunpack.c.h.b16 %v1674
    %v1855 = vunpack.c.l.b16 %v1675
    %v1856 = vunpack.c.h.b16 %v1675
    %v1857 = vunpack.c.l.b16 %v1676
    %v1858 = vunpack.c.h.b16 %v1676
    %v1859 = vunpack.c.l.b16 %v1677
    %v1860 = vunpack.c.h.b16 %v1677
    %v1861 = vunpack.c.l.b16 %v1678
    %v1862 = vunpack.c.h.b16 %v1678
    %v1863 = vunpack.c.l.b16 %v1679
    %v1864 = vunpack.c.h.b16 %v1679
    %v1865 = vunpack.c.l.b16 %v1680
    %v1866 = vunpack.c.h.b16 %v1680
    %v1867 = vunpack.c.l.b16 %v1681
    %v1868 = vunpack.c.h.b16 %v1681
    %v1869 = vunpack.c.l.b16 %v1682
    %v1870 = vunpack.c.h.b16 %v1682
    %v1871 = vunpack.c.l.b16 %v1683
    %v1872 = vunpack.c.h.b16 %v1683
    %v1873 = vunpack.c.l.b16 %v1684
    %v1874 = vunpack.c.h.b16 %v1684
    %v1875 = vunpack.c.l.b16 %v1685
    %v1876 = vunpack.c.h.b16 %v1685
    %v1877 = vunpack.c.l.b16 %v1686
    %v1878 = vunpack.c.h.b16 %v1686
    %v1879 = vunpack.c.l.b16 %v1687
    %v1880 = vunpack.c.h.b16 %v1687
    %v1881 = vunpack.c.l.b16 %v1688
    %v1882 = vunpack.c.h.b16 %v1688
    %v1883 = vunpack.c.l.b16 %v1689
    %v1884 = vunpack.c.h.b16 %v1689
    %v1885 = vunpack.c.l.b16 %v1690
    %v1886 = vunpack.c.h.b16 %v1690
    %v1887 = vunpack.c.l.b16 %v1691
    %v1888 = vunpack.c.h.b16 %v1691
    %v1889 = vunpack.c.l.b16 %v1692
    %v1890 = vunpack.c.h.b16 %v1692
    %v1891 = vunpack.c.l.b16 %v1693
    %v1892 = vunpack.c.h.b16 %v1693
    %v1893 = vunpack.c.l.b16 %v1694
    %v1894 = vunpack.c.h.b16 %v1694
    %v1895 = vunpack.c.l.b16 %v1695
    %v1896 = vunpack.c.h.b16 %v1695
    %v1897 = vunpack.c.l.b16 %v1696
    %v1898 = vunpack.c.h.b16 %v1696
    %v1899 = vunpack.c.l.b16 %v1697
    %v1900 = vunpack.c.h.b16 %v1697
    %v1901 = vunpack.c.l.b16 %v1698
    %v1902 = vunpack.c.h.b16 %v1698
    %v1903 = vpack.c.b16 %v1777, %v1775
    %v1904 = vpack.c.b16 %v1778, %v1776
    %v1905 = vpack.c.b16 %v1781, %v1779
    %v1906 = vpack.c.b16 %v1782, %v1780
    %v1907 = vpack.c.b16 %v1785, %v1783
    %v1908 = vpack.c.b16 %v1786, %v1784
    %v1909 = vpack.c.b16 %v1789, %v1787
    %v1910 = vpack.c.b16 %v1790, %v1788
    %v1911 = vpack.c.b16 %v1793, %v1791
    %v1912 = vpack.c.b16 %v1794, %v1792
    %v1913 = vpack.c.b16 %v1797, %v1795
    %v1914 = vpack.c.b16 %v1798, %v1796
    %v1915 = vpack.c.b16 %v1801, %v1799
    %v1916 = vpack.c.b16 %v1802, %v1800
    %v1917 = vpack.c.b16 %v1805, %v1803
    %v1918 = vpack.c.b16 %v1806, %v1804
    %v1919 = vpack.c.b16 %v1809, %v1807
    %v1920 = vpack.c.b16 %v1810, %v1808
    %v1921 = vpack.c.b16 %v1813, %v1811
    %v1922 = vpack.c.b16 %v1814, %v1812
    %v1923 = vpack.c.b16 %v1817, %v1815
    %v1924 = vpack.c.b16 %v1818, %v1816
    %v1925 = vpack.c.b16 %v1821, %v1819
    %v1926 = vpack.c.b16 %v1822, %v1820
    %v1927 = vpack.c.b16 %v1825, %v1823
    %v1928 = vpack.c.b16 %v1826, %v1824
    %v1929 = vpack.c.b16 %v1829, %v1827
    %v1930 = vpack.c.b16 %v1830, %v1828
    %v1931 = vpack.c.b16 %v1833, %v1831
    %v1932 = vpack.c.b16 %v1834, %v1832
    %v1933 = vpack.c.b16 %v1837, %v1835
    %v1934 = vpack.c.b16 %v1838, %v1836
    %v1935 = vpack.c.b16 %v1841, %v1839
    %v1936 = vpack.c.b16 %v1842, %v1840
    %v1937 = vpack.c.b16 %v1845, %v1843
    %v1938 = vpack.c.b16 %v1846, %v1844
    %v1939 = vpack.c.b16 %v1849, %v1847
    %v1940 = vpack.c.b16 %v1850, %v1848
    %v1941 = vpack.c.b16 %v1853, %v1851
    %v1942 = vpack.c.b16 %v1854, %v1852
    %v1943 = vpack.c.b16 %v1857, %v1855
    %v1944 = vpack.c.b16 %v1858, %v1856
    %v1945 = vpack.c.b16 %v1861, %v1859
    %v1946 = vpack.c.b16 %v1862, %v1860
    %v1947 = vpack.c.b16 %v1865, %v1863
    %v1948 = vpack.c.b16 %v1866, %v1864
    %v1949 = vpack.c.b16 %v1869, %v1867
    %v1950 = vpack.c.b16 %v1870, %v1868
    %v1951 = vpack.c.b16 %v1873, %v1871
    %v1952 = vpack.c.b16 %v1874, %v1872
    %v1953 = vpack.c.b16 %v1877, %v1875
    %v1954 = vpack.c.b16 %v1878, %v1876
    %v1955 = vpack.c.b16 %v1881, %v1879
    %v1956 = vpack.c.b16 %v1882, %v1880
    %v1957 = vpack.c.b16 %v1885, %v1883
    %v1958 = vpack.c.b16 %v1886, %v1884
    %v1959 = vpack.c.b16 %v1889, %v1887
    %v1960 = vpack.c.b16 %v1890, %v1888
    %v1961 = vpack.c.b16 %v1893, %v1891
    %v1962 = vpack.c.b16 %v1894, %v1892
    %v1963 = vpack.c.b16 %v1897, %v1895
    %v1964 = vpack.c.b16 %v1898, %v1896
    %v1965 = vpack.c.b16 %v1901, %v1899
    %v1966 = vpack.c.b16 %v1902, %v1900
    %2031 = vmatprep.subr.bf16.mxu0 %v1918
    %2032 = vmatpush1.bf16.msra.mxu0 %v1917
    %2033 = vmatprep.subr.bf16.mxu0 %v1916
    %2034 = vmatpush1.bf16.msra.mxu0 %v1915
    %2035 = vmatprep.subr.bf16.mxu0 %v1914
    %2036 = vmatpush1.bf16.msra.mxu0 %v1913
    %2037 = vmatprep.subr.bf16.mxu0 %v1912
    %2038 = vmatpush1.bf16.msra.mxu0 %v1911
    %2039 = vmatprep.subr.bf16.mxu0 %v1910
    %2040 = vmatpush1.bf16.msra.mxu0 %v1909
    %2041 = vmatprep.subr.bf16.mxu0 %v1908
    %2042 = vmatpush1.bf16.msra.mxu0 %v1907
    %2043 = vmatprep.subr.bf16.mxu0 %v1906
    %2044 = vmatpush1.bf16.msra.mxu0 %v1905
    %2045 = vmatprep.subr.bf16.mxu0 %v1904
    %2046 = vmatpush1.bf16.msra.mxu0 %v1903
    %2047 = vmatprep.subr.bf16.mxu0 %v1934
    %2048 = vmatpush2.bf16.msra.mxu0 %v1933
    %2049 = vmatprep.subr.bf16.mxu0 %v1932
    %2050 = vmatpush2.bf16.msra.mxu0 %v1931
    %2051 = vmatprep.subr.bf16.mxu0 %v1930
    %2052 = vmatpush2.bf16.msra.mxu0 %v1929
    %2053 = vmatprep.subr.bf16.mxu0 %v1928
    %2054 = vmatpush2.bf16.msra.mxu0 %v1927
    %2055 = vmatprep.subr.bf16.mxu0 %v1926
    %2056 = vmatpush2.bf16.msra.mxu0 %v1925
    %2057 = vmatprep.subr.bf16.mxu0 %v1924
    %2058 = vmatpush2.bf16.msra.mxu0 %v1923
    %2059 = vmatprep.subr.bf16.mxu0 %v1922
    %2060 = vmatpush2.bf16.msra.mxu0 %v1921
    %2061 = vmatprep.subr.bf16.mxu0 %v1920
    %2062 = vmatpush2.bf16.msra.mxu0 %v1919
    %2063 = vmatprep.mubr.bf16.mxu0 %v1632
    %2064 = vmatmul.mubr.bf16.gmra.mxu0 %v1631
    %v2065 = vpop.f32.mrf.mxu0
    %v2066 = vadd.f32 %v1704, %v2065
    %v2067 = vpop.f32.mrf.mxu0
    %v2068 = vadd.f32 %v1708, %v2067
    %v2069 = vpop.f32.mrf.mxu0
    %v2070 = vpop.f32.mrf.mxu0
    %2071 = vdwg.mxu0
    %2072 = vmatprep.subr.bf16.mxu0 %v1950
    %2073 = vmatpush1.bf16.msra.mxu0 %v1949
    %2074 = vmatprep.subr.bf16.mxu0 %v1948
    %2075 = vmatpush1.bf16.msra.mxu0 %v1947
    %2076 = vmatprep.subr.bf16.mxu0 %v1946
    %2077 = vmatpush1.bf16.msra.mxu0 %v1945
    %2078 = vmatprep.subr.bf16.mxu0 %v1944
    %2079 = vmatpush1.bf16.msra.mxu0 %v1943
    %2080 = vmatprep.subr.bf16.mxu0 %v1942
    %2081 = vmatpush1.bf16.msra.mxu0 %v1941
    %2082 = vmatprep.subr.bf16.mxu0 %v1940
    %2083 = vmatpush1.bf16.msra.mxu0 %v1939
    %2084 = vmatprep.subr.bf16.mxu0 %v1938
    %2085 = vmatpush1.bf16.msra.mxu0 %v1937
    %2086 = vmatprep.subr.bf16.mxu0 %v1936
    %2087 = vmatpush1.bf16.msra.mxu0 %v1935
    %2088 = vmatprep.subr.bf16.mxu0 %v1966
    %2089 = vmatpush2.bf16.msra.mxu0 %v1965
    %2090 = vmatprep.subr.bf16.mxu0 %v1964
    %2091 = vmatpush2.bf16.msra.mxu0 %v1963
    %2092 = vmatprep.subr.bf16.mxu0 %v1962
    %2093 = vmatpush2.bf16.msra.mxu0 %v1961
    %2094 = vmatprep.subr.bf16.mxu0 %v1960
    %2095 = vmatpush2.bf16.msra.mxu0 %v1959
    %2096 = vmatprep.subr.bf16.mxu0 %v1958
    %2097 = vmatpush2.bf16.msra.mxu0 %v1957
    %2098 = vmatprep.subr.bf16.mxu0 %v1956
    %2099 = vmatpush2.bf16.msra.mxu0 %v1955
    %2100 = vmatprep.subr.bf16.mxu0 %v1954
    %2101 = vmatpush2.bf16.msra.mxu0 %v1953
    %2102 = vmatprep.subr.bf16.mxu0 %v1952
    %2103 = vmatpush2.bf16.msra.mxu0 %v1951
    %2104 = vmatprep.mubr.bf16.mxu0 %v1634
    %2105 = vmatmul.mubr.bf16.gmra.mxu0 %v1633
    %v2106 = vpop.f32.mrf.mxu0
    %v2107 = vadd.f32 %v2066, %v2106
    %v2108 = vpop.f32.mrf.mxu0
    %v2109 = vadd.f32 %v2068, %v2108
    %v2110 = vpop.f32.mrf.mxu0
    %v2111 = vpop.f32.mrf.mxu0
    %2112 = vdwg.mxu0
    %v2113 = vmax.f32 %v2107, 0.0
    %v2114 = vmax.f32 %v2109, 0.0
    %v2115 = vpack.c.bf16 %v2113, %v2113
    %v2116 = vpack.c.bf16 %v2114, %v2114
    %v2117 = vld [vmem:[#allocation7] sm:$0xf]
    %v2118 = vld [vmem:[#allocation7 + $0x4] sm:$0xf]
    %v2119 = vld [vmem:[#allocation7 + $0x8] sm:$0xf]
    %v2120 = vld [vmem:[#allocation7 + $0xc] sm:$0xf]
    %v2121 = vld [vmem:[#allocation7 + $0x10] sm:$0xf]
    %v2122 = vld [vmem:[#allocation7 + $0x14] sm:$0xf]
    %v2123 = vld [vmem:[#allocation7 + $0x18] sm:$0xf]
    %v2124 = vld [vmem:[#allocation7 + $0x1c] sm:$0xf]
    %v2125 = vld [vmem:[#allocation7 + $0x20] sm:$0xf]
    %v2126 = vld [vmem:[#allocation7 + $0x24] sm:$0xf]
    %v2127 = vld [vmem:[#allocation7 + $0x28] sm:$0xf]
    %v2128 = vld [vmem:[#allocation7 + $0x2c] sm:$0xf]
    %v2129 = vld [vmem:[#allocation7 + $0x30] sm:$0xf]
    %v2130 = vld [vmem:[#allocation7 + $0x34] sm:$0xf]
    %v2131 = vld [vmem:[#allocation7 + $0x38] sm:$0xf]
    %v2132 = vld [vmem:[#allocation7 + $0x3c] sm:$0xf]
    %v2133 = vld [vmem:[#allocation7 + $0x40] sm:$0xf]
    %v2134 = vld [vmem:[#allocation7 + $0x44] sm:$0xf]
    %v2135 = vld [vmem:[#allocation7 + $0x48] sm:$0xf]
    %v2136 = vld [vmem:[#allocation7 + $0x4c] sm:$0xf]
    %v2137 = vld [vmem:[#allocation7 + $0x50] sm:$0xf]
    %v2138 = vld [vmem:[#allocation7 + $0x54] sm:$0xf]
    %v2139 = vld [vmem:[#allocation7 + $0x58] sm:$0xf]
    %v2140 = vld [vmem:[#allocation7 + $0x5c] sm:$0xf]
    %v2141 = vld [vmem:[#allocation7 + $0x60] sm:$0xf]
    %v2142 = vld [vmem:[#allocation7 + $0x64] sm:$0xf]
    %v2143 = vld [vmem:[#allocation7 + $0x68] sm:$0xf]
    %v2144 = vld [vmem:[#allocation7 + $0x6c] sm:$0xf]
    %v2145 = vld [vmem:[#allocation7 + $0x70] sm:$0xf]
    %v2146 = vld [vmem:[#allocation7 + $0x74] sm:$0xf]
    %v2147 = vld [vmem:[#allocation7 + $0x78] sm:$0xf]
    %v2148 = vld [vmem:[#allocation7 + $0x7c] sm:$0xf]
    %v2149 = vld [vmem:[%s6] sm:$0x1]
    %v2151 = vlaneseq
    %v2152 = vshrl.u32 %v2151, 7
    %v2153 = vsub.s32 0, %v2152
    %v2154 = vrot.slane %v2149, %v2153
    %v2188 = vunpack.c.l.b16 %v2117
    %v2189 = vunpack.c.l.b16 %v2118
    %v2190 = vunpack.c.l.b16 %v2119
    %v2191 = vunpack.c.l.b16 %v2120
    %v2192 = vunpack.c.l.b16 %v2121
    %v2193 = vunpack.c.l.b16 %v2122
    %v2194 = vunpack.c.l.b16 %v2123
    %v2195 = vunpack.c.l.b16 %v2124
    %v2196 = vunpack.c.l.b16 %v2125
    %v2197 = vunpack.c.l.b16 %v2126
    %v2198 = vunpack.c.l.b16 %v2127
    %v2199 = vunpack.c.l.b16 %v2128
    %v2200 = vunpack.c.l.b16 %v2129
    %v2201 = vunpack.c.l.b16 %v2130
    %v2202 = vunpack.c.l.b16 %v2131
    %v2203 = vunpack.c.l.b16 %v2132
    %v2204 = vunpack.c.l.b16 %v2133
    %v2205 = vunpack.c.l.b16 %v2134
    %v2206 = vunpack.c.l.b16 %v2135
    %v2207 = vunpack.c.l.b16 %v2136
    %v2208 = vunpack.c.l.b16 %v2137
    %v2209 = vunpack.c.l.b16 %v2138
    %v2210 = vunpack.c.l.b16 %v2139
    %v2211 = vunpack.c.l.b16 %v2140
    %v2212 = vunpack.c.l.b16 %v2141
    %v2213 = vunpack.c.l.b16 %v2142
    %v2214 = vunpack.c.l.b16 %v2143
    %v2215 = vunpack.c.l.b16 %v2144
    %v2216 = vunpack.c.l.b16 %v2145
    %v2217 = vunpack.c.l.b16 %v2146
    %v2218 = vunpack.c.l.b16 %v2147
    %v2219 = vunpack.c.l.b16 %v2148
    %v2220 = vpack.c.b16 %v2189, %v2188
    %v2221 = vpack.c.b16 %v2191, %v2190
    %v2222 = vpack.c.b16 %v2193, %v2192
    %v2223 = vpack.c.b16 %v2195, %v2194
    %v2224 = vpack.c.b16 %v2197, %v2196
    %v2225 = vpack.c.b16 %v2199, %v2198
    %v2226 = vpack.c.b16 %v2201, %v2200
    %v2227 = vpack.c.b16 %v2203, %v2202
    %v2228 = vpack.c.b16 %v2205, %v2204
    %v2229 = vpack.c.b16 %v2207, %v2206
    %v2230 = vpack.c.b16 %v2209, %v2208
    %v2231 = vpack.c.b16 %v2211, %v2210
    %v2232 = vpack.c.b16 %v2213, %v2212
    %v2233 = vpack.c.b16 %v2215, %v2214
    %v2234 = vpack.c.b16 %v2217, %v2216
    %v2235 = vpack.c.b16 %v2219, %v2218
    %2252 = vmatprep.subr.bf16.mxu0 0
    %2253 = vmatpush1.bf16.msra.mxu0 %v2227
    %2254 = vmatprep.subr.bf16.mxu0 0
    %2255 = vmatpush1.bf16.msra.mxu0 %v2226
    %2256 = vmatprep.subr.bf16.mxu0 0
    %2257 = vmatpush1.bf16.msra.mxu0 %v2225
    %2258 = vmatprep.subr.bf16.mxu0 0
    %2259 = vmatpush1.bf16.msra.mxu0 %v2224
    %2260 = vmatprep.subr.bf16.mxu0 0
    %2261 = vmatpush1.bf16.msra.mxu0 %v2223
    %2262 = vmatprep.subr.bf16.mxu0 0
    %2263 = vmatpush1.bf16.msra.mxu0 %v2222
    %2264 = vmatprep.subr.bf16.mxu0 0
    %2265 = vmatpush1.bf16.msra.mxu0 %v2221
    %2266 = vmatprep.subr.bf16.mxu0 0
    %2267 = vmatpush1.bf16.msra.mxu0 %v2220
    %2268 = vmatprep.subr.bf16.mxu0 0
    %2269 = vmatpush2.bf16.msra.mxu0 %v2235
    %2270 = vmatprep.subr.bf16.mxu0 0
    %2271 = vmatpush2.bf16.msra.mxu0 %v2234
    %2272 = vmatprep.subr.bf16.mxu0 0
    %2273 = vmatpush2.bf16.msra.mxu0 %v2233
    %2274 = vmatprep.subr.bf16.mxu0 0
    %2275 = vmatpush2.bf16.msra.mxu0 %v2232
    %2276 = vmatprep.subr.bf16.mxu0 0
    %2277 = vmatpush2.bf16.msra.mxu0 %v2231
    %2278 = vmatprep.subr.bf16.mxu0 0
    %2279 = vmatpush2.bf16.msra.mxu0 %v2230
    %2280 = vmatprep.subr.bf16.mxu0 0
    %2281 = vmatpush2.bf16.msra.mxu0 %v2229
    %2282 = vmatprep.subr.bf16.mxu0 0
    %2283 = vmatpush2.bf16.msra.mxu0 %v2228
    %2284 = vmatprep.mubr.bf16.mxu0 %v2116
    %2285 = vmatmul.mubr.bf16.gmra.mxu0 %v2115
    %v2286 = vpop.f32.mrf.mxu0
    %v2287 = vadd.f32 %v2154, %v2286
    %v2288 = vpop.f32.mrf.mxu0
    %v2289 = vpop.f32.mrf.mxu0
    %v2290 = vpop.f32.mrf.mxu0
    %2291 = vdwg.mxu0
    %2292 = vst [vmem:[#allocation8] sm:$0xff] %v2287
    // Predicated region
    $region42: #{big_model_forward.1} parent=1 // pred_check
      _
    $region43: #{big_model_forward.1} parent=1 // pred_check_branch
      %2294 = sbr.rel (0) target = $region45
    $region44: #{big_model_forward.1} parent=1 // pred_region
      %s2296 = ssub.s32 128, 128
      %2297 = vsyncadd [#allocation4], %s2296
      %s2299 = sshll.u32 [#allocation8], 4
      %s2300 = int_to_ptr.vmem [resolvable:$true] %s2299
      %2302 = dma.vmem_to_hbm [thread:$0]  %s2300, 128, %s7, [#allocation4]
    $region45: #{big_model_forward.1} parent=1 // pred_fallthru
      _
    // Predicated region
    $region46: #{big_model_forward.1} parent=1 // pred_check
      _
    $region47: #{big_model_forward.1} parent=1 // pred_check_branch
      %2304 = sbr.rel (0) target = $region49
    $region48: #{big_model_forward.1} parent=1 // pred_region
      %2305 = dma.done [#allocation4], 128
    $region49: #{big_model_forward.1} parent=1 // pred_fallthru
      _
    %2306 = vsyncpa [#allocation3], 1
    %2307 = vsyncpa [#allocation6], 1
    %2308 = vsyncpa [#allocation4], 1

</llo_original>
